<compile_context>
chip_gen: v5e
topology: v5e:2x2
jax: 0.10.0
libtpu: 0.0.40
codegen_flags: <defaults>
</compile_context>

<pallas_src>
import math

import jax
import jax.numpy as jnp
from jax import lax
from jax.experimental import pallas as pl
from jax.experimental.pallas import tpu as pltpu

# Small shapes consistent with how BSConvU is used inside rfdnfinalB5.
BATCH = 2
CIN = 4
COUT = 32
H = W = 16
KS = 3  # kernel_size=3, stride=1, padding=1, dilation=1, bias=True (module defaults)


def bsconvu_forward(x_nchw, pw_w, dw_w, dw_b):
    """Fused BSConvU forward.

    x_nchw: (N, Cin, H, W) float32
    pw_w:   (Cout, Cin)      -- torch pw.weight (Cout, Cin, 1, 1) squeezed
    dw_w:   (Cout, 3, 3)     -- torch dw.weight (Cout, 1, 3, 3) squeezed
    dw_b:   (Cout,)          -- torch dw.bias
    returns (N, Cout, H, W) float32
    """
    n, cin, h, w = x_nchw.shape
    cout = pw_w.shape[0]
    hp, wp = h + 2, w + 2  # padding=1 on each side

    # NCHW -> NHWC, zero-pad spatially once up front (pw has no bias, so the
    # zero padding commutes with the pointwise conv).
    x = jnp.transpose(x_nchw, (0, 2, 3, 1)).astype(jnp.float32)
    xp = jnp.pad(x, ((0, 0), (1, 1), (1, 1), (0, 0)))
    x_flat = xp.reshape(n, hp, wp * cin)                                # (N, HP, WP*CIN)

    # Block-diagonal pointwise weight: kron(I_WP, W_pw^T), shape (WP*CIN, WP*Cout).
    # The matmul output is then already in the lane-dense flattened layout.
    w_pw_big = jnp.kron(jnp.eye(wp, dtype=jnp.float32),
                        pw_w.astype(jnp.float32).T)                     # (WP*CIN, WP*Cout)

    # Depthwise weights / bias tiled across the W positions of the lane axis.
    w_dw_taps = jnp.tile(dw_w.astype(jnp.float32).reshape(cout, 9).T, (1, w))  # (9, W*Cout)
    b_dw_t = jnp.tile(dw_b.astype(jnp.float32).reshape(1, cout), (1, w))       # (1, W*Cout)

    def kernel(x_ref, wpw_ref, wdw_ref, b_ref, o_ref):
        # x_ref:(HP, WP*CIN)  wpw_ref:(WP*CIN, WP*Cout)  wdw_ref:(9, W*Cout)
        # b_ref:(1, W*Cout)   o_ref:(H, W*Cout)
        # Pointwise 1x1 conv on the MXU; output is lane-dense (HP, WP*Cout).
        yp = jnp.dot(x_ref[...], wpw_ref[...],
                     preferred_element_type=jnp.float32,
                     precision=lax.Precision.HIGHEST)                   # (HP, WP*Cout)
        # Depthwise 3x3 (stride 1, pad 1): 9 shifted windows of the padded slab,
        # each a full-width VPU FMA against W-tiled per-channel weights.
        acc = jnp.zeros((h, w * cout), jnp.float32)
        for k in range(9):
            dy, dx = k // 3, k % 3
            tap = yp[dy:dy + h, dx * cout:dx * cout + w * cout]         # (H, W*Cout)
            acc = acc + tap * wdw_ref[k, :]
        o_ref[...] = acc + b_ref[...]

    out = pl.pallas_call(
        kernel,
        out_shape=jax.ShapeDtypeStruct((n, h, w * cout), jnp.float32),
        grid_spec=pltpu.PrefetchScalarGridSpec(
            num_scalar_prefetch=0,
            grid=(n,),
            in_specs=[
                pl.BlockSpec((None, hp, wp * cin), lambda b: (b, 0, 0)),
                pl.BlockSpec((wp * cin, wp * cout), lambda b: (0, 0)),
                pl.BlockSpec((9, w * cout), lambda b: (0, 0)),
                pl.BlockSpec((1, w * cout), lambda b: (0, 0)),
            ],
            out_specs=pl.BlockSpec((None, h, w * cout), lambda b: (b, 0, 0)),
        ),
        compiler_params=pltpu.CompilerParams(
            dimension_semantics=("parallel",)),   # shard images over 2 TCs on v7x
    )(x_flat, w_pw_big, w_dw_taps, b_dw_t)

    # (N, H, W*Cout) -> (N, H, W, Cout) is a free row-major reinterpretation.
    out = out.reshape(n, h, w, cout)
    return jnp.transpose(out, (0, 3, 1, 2))       # back to NCHW


def bsconvu_reference(x_nchw, pw_w, dw_w, dw_b):
    """Pure-JAX reference (matches the PyTorch module)."""
    cout = pw_w.shape[0]
    y = lax.conv_general_dilated(
        x_nchw, pw_w.reshape(cout, -1, 1, 1),
        window_strides=(1, 1), padding='VALID',
        dimension_numbers=('NCHW', 'OIHW', 'NCHW'),
        precision=lax.Precision.HIGHEST)
    y = lax.conv_general_dilated(
        y, dw_w.reshape(cout, 1, KS, KS),
        window_strides=(1, 1), padding=((1, 1), (1, 1)),
        dimension_numbers=('NCHW', 'OIHW', 'NCHW'),
        feature_group_count=cout,
        precision=lax.Precision.HIGHEST)
    return y + dw_b.reshape(1, cout, 1, 1)


if __name__ == "__main__":
    key = jax.random.PRNGKey(0)
    kx, kpw, kdw, kb = jax.random.split(key, 4)
    x = jax.random.normal(kx, (BATCH, CIN, H, W), jnp.float32)
    pw_w = jax.random.normal(kpw, (COUT, CIN), jnp.float32) / math.sqrt(CIN)
    dw_w = jax.random.normal(kdw, (COUT, KS, KS), jnp.float32) / KS
    dw_b = jax.random.normal(kb, (COUT,), jnp.float32) * 0.1

    fwd = jax.jit(bsconvu_forward)
    out = jax.block_until_ready(fwd(x, pw_w, dw_w, dw_b))

    assert out.shape == (BATCH, COUT, H, W), out.shape
    assert bool(jnp.all(jnp.isfinite(out)))

    ref = bsconvu_reference(x, pw_w, dw_w, dw_b)
    max_err = float(jnp.max(jnp.abs(out - ref)))
    # Loose bound: tolerant of MXU precision-path differences, still catches
    # any layout / tap-indexing bug (which would produce O(1) errors).
    assert max_err < 1e-2, max_err

    print("KERNEL_OK")
</pallas_src>

<mosaic_0001>
module attributes {stable_mosaic.version = 11 : i64} {
  func.func @kernel(%arg0: i32, %arg1: memref<1x18x72xf32, #tpu.memory_space<vmem>>, %arg2: memref<72x576xf32, #tpu.memory_space<vmem>>, %arg3: memref<9x512xf32, #tpu.memory_space<vmem>>, %arg4: memref<1x512xf32, #tpu.memory_space<vmem>>, %arg5: memref<1x16x512xf32, #tpu.memory_space<vmem>>) attributes {dimension_semantics = [#tpu.dimension_semantics<parallel>], iteration_bounds = array<i64: 2>, scalar_prefetch = 0 : i64, scratch_operands = 0 : i64, tpu.core_type = #tpu.core_type<tc>, window_params = [{transform_indices = @transform_0, window_bounds = array<i64: 1, 18, 72>}, {pipeline_mode = #tpu.pipeline_mode<synchronous>, transform_indices = @transform_1, window_bounds = array<i64: 72, 576>}, {pipeline_mode = #tpu.pipeline_mode<synchronous>, transform_indices = @transform_2, window_bounds = array<i64: 9, 512>}, {pipeline_mode = #tpu.pipeline_mode<synchronous>, transform_indices = @transform_3, window_bounds = array<i64: 1, 512>}, {transform_indices = @transform_4, window_bounds = array<i64: 1, 16, 512>}]} {
    %c0 = arith.constant 0 : index
    %c0_0 = arith.constant 0 : index
    %c0_1 = arith.constant 0 : index
    %0 = vector.load %arg1[%c0, %c0_0, %c0_1] : memref<1x18x72xf32, #tpu.memory_space<vmem>>, vector<1x18x72xf32>
    %1 = vector.shape_cast %0 : vector<1x18x72xf32> to vector<18x72xf32>
    %c0_2 = arith.constant 0 : index
    %c0_3 = arith.constant 0 : index
    %2 = vector.load %arg2[%c0_2, %c0_3] : memref<72x576xf32, #tpu.memory_space<vmem>>, vector<72x576xf32>
    %cst = arith.constant dense<0.000000e+00> : vector<18x576xf32>
    %3 = tpu.matmul %1, %2, %cst {dimension_numbers = #tpu.dot_dimension_numbers<[1], [0], [0], [1], [0, 0, 1, 1], [], []>, precision = #tpu.contract_precision<fp32>} : vector<18x72xf32>, vector<72x576xf32>, vector<18x576xf32> -> vector<18x576xf32>
    %cst_4 = arith.constant 0.000000e+00 : f32
    %4 = vector.broadcast %cst_4 : f32 to vector<16x512xf32>
    %5 = vector.extract_strided_slice %3 {offsets = [0, 0], sizes = [16, 512], strides = [1, 1]} : vector<18x576xf32> to vector<16x512xf32>
    %c0_5 = arith.constant 0 : index
    %c0_6 = arith.constant 0 : index
    %6 = vector.load %arg3[%c0_5, %c0_6] : memref<9x512xf32, #tpu.memory_space<vmem>>, vector<1x512xf32>
    %7 = vector.shape_cast %6 : vector<1x512xf32> to vector<512xf32>
    %8 = vector.shape_cast %7 : vector<512xf32> to vector<1x512xf32>
    %9 = vector.broadcast %8 : vector<1x512xf32> to vector<16x512xf32>
    %10 = arith.mulf %5, %9 : vector<16x512xf32>
    %11 = arith.addf %4, %10 : vector<16x512xf32>
    %12 = vector.extract_strided_slice %3 {offsets = [0, 32], sizes = [16, 512], strides = [1, 1]} : vector<18x576xf32> to vector<16x512xf32>
    %c1 = arith.constant 1 : index
    %c0_7 = arith.constant 0 : index
    %13 = vector.load %arg3[%c1, %c0_7] : memref<9x512xf32, #tpu.memory_space<vmem>>, vector<1x512xf32>
    %14 = vector.shape_cast %13 : vector<1x512xf32> to vector<512xf32>
    %15 = vector.shape_cast %14 : vector<512xf32> to vector<1x512xf32>
    %16 = vector.broadcast %15 : vector<1x512xf32> to vector<16x512xf32>
    %17 = arith.mulf %12, %16 : vector<16x512xf32>
    %18 = arith.addf %11, %17 : vector<16x512xf32>
    %19 = vector.extract_strided_slice %3 {offsets = [0, 64], sizes = [16, 512], strides = [1, 1]} : vector<18x576xf32> to vector<16x512xf32>
    %c2 = arith.constant 2 : index
    %c0_8 = arith.constant 0 : index
    %20 = vector.load %arg3[%c2, %c0_8] : memref<9x512xf32, #tpu.memory_space<vmem>>, vector<1x512xf32>
    %21 = vector.shape_cast %20 : vector<1x512xf32> to vector<512xf32>
    %22 = vector.shape_cast %21 : vector<512xf32> to vector<1x512xf32>
    %23 = vector.broadcast %22 : vector<1x512xf32> to vector<16x512xf32>
    %24 = arith.mulf %19, %23 : vector<16x512xf32>
    %25 = arith.addf %18, %24 : vector<16x512xf32>
    %26 = vector.extract_strided_slice %3 {offsets = [1, 0], sizes = [16, 512], strides = [1, 1]} : vector<18x576xf32> to vector<16x512xf32>
    %c3 = arith.constant 3 : index
    %c0_9 = arith.constant 0 : index
    %27 = vector.load %arg3[%c3, %c0_9] : memref<9x512xf32, #tpu.memory_space<vmem>>, vector<1x512xf32>
    %28 = vector.shape_cast %27 : vector<1x512xf32> to vector<512xf32>
    %29 = vector.shape_cast %28 : vector<512xf32> to vector<1x512xf32>
    %30 = vector.broadcast %29 : vector<1x512xf32> to vector<16x512xf32>
    %31 = arith.mulf %26, %30 : vector<16x512xf32>
    %32 = arith.addf %25, %31 : vector<16x512xf32>
    %33 = vector.extract_strided_slice %3 {offsets = [1, 32], sizes = [16, 512], strides = [1, 1]} : vector<18x576xf32> to vector<16x512xf32>
    %c4 = arith.constant 4 : index
    %c0_10 = arith.constant 0 : index
    %34 = vector.load %arg3[%c4, %c0_10] : memref<9x512xf32, #tpu.memory_space<vmem>>, vector<1x512xf32>
    %35 = vector.shape_cast %34 : vector<1x512xf32> to vector<512xf32>
    %36 = vector.shape_cast %35 : vector<512xf32> to vector<1x512xf32>
    %37 = vector.broadcast %36 : vector<1x512xf32> to vector<16x512xf32>
    %38 = arith.mulf %33, %37 : vector<16x512xf32>
    %39 = arith.addf %32, %38 : vector<16x512xf32>
    %40 = vector.extract_strided_slice %3 {offsets = [1, 64], sizes = [16, 512], strides = [1, 1]} : vector<18x576xf32> to vector<16x512xf32>
    %c5 = arith.constant 5 : index
    %c0_11 = arith.constant 0 : index
    %41 = vector.load %arg3[%c5, %c0_11] : memref<9x512xf32, #tpu.memory_space<vmem>>, vector<1x512xf32>
    %42 = vector.shape_cast %41 : vector<1x512xf32> to vector<512xf32>
    %43 = vector.shape_cast %42 : vector<512xf32> to vector<1x512xf32>
    %44 = vector.broadcast %43 : vector<1x512xf32> to vector<16x512xf32>
    %45 = arith.mulf %40, %44 : vector<16x512xf32>
    %46 = arith.addf %39, %45 : vector<16x512xf32>
    %47 = vector.extract_strided_slice %3 {offsets = [2, 0], sizes = [16, 512], strides = [1, 1]} : vector<18x576xf32> to vector<16x512xf32>
    %c6 = arith.constant 6 : index
    %c0_12 = arith.constant 0 : index
    %48 = vector.load %arg3[%c6, %c0_12] : memref<9x512xf32, #tpu.memory_space<vmem>>, vector<1x512xf32>
    %49 = vector.shape_cast %48 : vector<1x512xf32> to vector<512xf32>
    %50 = vector.shape_cast %49 : vector<512xf32> to vector<1x512xf32>
    %51 = vector.broadcast %50 : vector<1x512xf32> to vector<16x512xf32>
    %52 = arith.mulf %47, %51 : vector<16x512xf32>
    %53 = arith.addf %46, %52 : vector<16x512xf32>
    %54 = vector.extract_strided_slice %3 {offsets = [2, 32], sizes = [16, 512], strides = [1, 1]} : vector<18x576xf32> to vector<16x512xf32>
    %c7 = arith.constant 7 : index
    %c0_13 = arith.constant 0 : index
    %55 = vector.load %arg3[%c7, %c0_13] : memref<9x512xf32, #tpu.memory_space<vmem>>, vector<1x512xf32>
    %56 = vector.shape_cast %55 : vector<1x512xf32> to vector<512xf32>
    %57 = vector.shape_cast %56 : vector<512xf32> to vector<1x512xf32>
    %58 = vector.broadcast %57 : vector<1x512xf32> to vector<16x512xf32>
    %59 = arith.mulf %54, %58 : vector<16x512xf32>
    %60 = arith.addf %53, %59 : vector<16x512xf32>
    %61 = vector.extract_strided_slice %3 {offsets = [2, 64], sizes = [16, 512], strides = [1, 1]} : vector<18x576xf32> to vector<16x512xf32>
    %c8 = arith.constant 8 : index
    %c0_14 = arith.constant 0 : index
    %62 = vector.load %arg3[%c8, %c0_14] : memref<9x512xf32, #tpu.memory_space<vmem>>, vector<1x512xf32>
    %63 = vector.shape_cast %62 : vector<1x512xf32> to vector<512xf32>
    %64 = vector.shape_cast %63 : vector<512xf32> to vector<1x512xf32>
    %65 = vector.broadcast %64 : vector<1x512xf32> to vector<16x512xf32>
    %66 = arith.mulf %61, %65 : vector<16x512xf32>
    %67 = arith.addf %60, %66 : vector<16x512xf32>
    %c0_15 = arith.constant 0 : index
    %c0_16 = arith.constant 0 : index
    %68 = vector.load %arg4[%c0_15, %c0_16] : memref<1x512xf32, #tpu.memory_space<vmem>>, vector<1x512xf32>
    %69 = vector.broadcast %68 : vector<1x512xf32> to vector<16x512xf32>
    %70 = arith.addf %67, %69 : vector<16x512xf32>
    %c0_17 = arith.constant 0 : index
    %c0_18 = arith.constant 0 : index
    %c0_19 = arith.constant 0 : index
    %71 = vector.load %arg5[%c0_17, %c0_18, %c0_19] : memref<1x16x512xf32, #tpu.memory_space<vmem>>, vector<1x16x512xf32>
    %72 = vector.shape_cast %71 : vector<1x16x512xf32> to vector<16x512xf32>
    %73 = vector.shape_cast %70 : vector<16x512xf32> to vector<1x16x512xf32>
    tpu.vector_store %arg5[%c0_17, %c0_18, %c0_19], %73 {strides = array<i32>} : memref<1x16x512xf32, #tpu.memory_space<vmem>>, vector<1x16x512xf32>,
    return
  }
  func.func @transform_0(%arg0: i32) -> (i32, i32, i32) {
    %c0_i32 = arith.constant 0 : i32
    %c0_i32_0 = arith.constant 0 : i32
    %c0_i32_1 = arith.constant 0 : i32
    return %arg0, %c0_i32, %c0_i32_0 : i32, i32, i32
  }
  func.func @transform_1(%arg0: i32) -> (i32, i32) {
    %c0_i32 = arith.constant 0 : i32
    %c0_i32_0 = arith.constant 0 : i32
    %c0_i32_1 = arith.constant 0 : i32
    return %c0_i32, %c0_i32_0 : i32, i32
  }
  func.func @transform_2(%arg0: i32) -> (i32, i32) {
    %c0_i32 = arith.constant 0 : i32
    %c0_i32_0 = arith.constant 0 : i32
    %c0_i32_1 = arith.constant 0 : i32
    return %c0_i32, %c0_i32_0 : i32, i32
  }
  func.func @transform_3(%arg0: i32) -> (i32, i32) {
    %c0_i32 = arith.constant 0 : i32
    %c0_i32_0 = arith.constant 0 : i32
    %c0_i32_1 = arith.constant 0 : i32
    return %c0_i32, %c0_i32_0 : i32, i32
  }
  func.func @transform_4(%arg0: i32) -> (i32, i32, i32) {
    %c0_i32 = arith.constant 0 : i32
    %c0_i32_0 = arith.constant 0 : i32
    %c0_i32_1 = arith.constant 0 : i32
    return %arg0, %c0_i32, %c0_i32_0 : i32, i32, i32
  }
}

</mosaic_0001>

<llo_original>
// kernel: tile.13
$region0: #{tile.13}
  %s0 = inlined_call_operand.vmem [shape: f32[9,16,32], index: 0, kind: input, shape index: {}]
  %s1 = inlined_call_operand.vmem [shape: f32[9,512], index: 1, kind: output, shape index: {}]
  %v2 = vld [vmem:[%s0] ss:$4 sm:$0xff]
  %vm3 = vcmask 261120
  %4 = vst.msk [vmem:[%s1] ss:$8 sm:$0xf] %vm3, %v2
  %s5 = scalar_lea.vmem %s1, 4294967265
  %6 = vst.msk [vmem:[%s5] ss:$8 sm:$0xf0] %vm3, %v2
  %s7 = scalar_lea.vmem %s0, 32
  %v8 = vld [vmem:[%s7] ss:$4 sm:$0xff]
  %vm9 = vcmask 261120
  %s10 = scalar_lea.vmem %s1, 2
  %11 = vst.msk [vmem:[%s10] ss:$8 sm:$0xf] %vm9, %v8
  %s12 = scalar_lea.vmem %s1, 4294967267
  %13 = vst.msk [vmem:[%s12] ss:$8 sm:$0xf0] %vm9, %v8
  %s14 = scalar_lea.vmem %s0, 64
  %v15 = vld [vmem:[%s14] ss:$4 sm:$0xff]
  %vm16 = vcmask 261120
  %s17 = scalar_lea.vmem %s1, 4
  %18 = vst.msk [vmem:[%s17] ss:$8 sm:$0xf] %vm16, %v15
  %s19 = scalar_lea.vmem %s1, 4294967269
  %20 = vst.msk [vmem:[%s19] ss:$8 sm:$0xf0] %vm16, %v15
  %s21 = scalar_lea.vmem %s0, 96
  %v22 = vld [vmem:[%s21] ss:$4 sm:$0xff]
  %vm23 = vcmask 261120
  %s24 = scalar_lea.vmem %s1, 6
  %25 = vst.msk [vmem:[%s24] ss:$8 sm:$0xf] %vm23, %v22
  %s26 = scalar_lea.vmem %s1, 4294967271
  %27 = vst.msk [vmem:[%s26] ss:$8 sm:$0xf0] %vm23, %v22
  %s28 = scalar_lea.vmem %s0, 128
  %v29 = vld [vmem:[%s28] ss:$4 sm:$0xf]
  %vm30 = vcmask 261120
  %s31 = scalar_lea.vmem %s1, 32
  %32 = vst.msk [vmem:[%s31] ss:$8 sm:$0xf] %vm30, %v29
  %s33 = scalar_lea.vmem %s0, 3
  %s34 = smov 3
  %v35 = vld [vmem:[%s33] ss:$16 sm:%s34]
  %s36 = scalar_lea.vmem %s0, 3
  %s37 = smov 12
  %v38 = vld [vmem:[%s36] ss:$16 sm:%s37]
  %vm39 = vcmask 1043458
  %v40 = vsel %vm39, %v38, %v35
  %s41 = scalar_lea.vmem %s0, 3
  %s42 = smov 48
  %v43 = vld [vmem:[%s41] ss:$16 sm:%s42]
  %vm44 = vcmask 1045508
  %v45 = vsel %vm44, %v43, %v40
  %s46 = scalar_lea.vmem %s0, 3
  %s47 = smov 192
  %v48 = vld [vmem:[%s46] ss:$16 sm:%s47]
  %vm49 = vcmask 1047558
  %v50 = vsel %vm49, %v48, %v45
  %51 = vrot.lane.b32.xlu0 %v50, 96
  %v52 = vpop.permute.xlu0 %51
  %vm53 = vcmask 1048320
  %54 = vst.msk [vmem:[%s1] sm:$0xff] %vm53, %v52
  %s55 = scalar_lea.vmem %s0, 131
  %s56 = smov 3
  %v57 = vld [vmem:[%s55] ss:$-124 sm:%s56]
  %s58 = scalar_lea.vmem %s0, 4294967287
  %s59 = smov 12
  %v60 = vld [vmem:[%s58] ss:$16 sm:%s59]
  %vm61 = vcmask 1043458
  %v62 = vsel %vm61, %v60, %v57
  %s63 = scalar_lea.vmem %s0, 4294967287
  %s64 = smov 48
  %v65 = vld [vmem:[%s63] ss:$16 sm:%s64]
  %vm66 = vcmask 1045508
  %v67 = vsel %vm66, %v65, %v62
  %s68 = scalar_lea.vmem %s0, 4294967287
  %s69 = smov 192
  %v70 = vld [vmem:[%s68] ss:$16 sm:%s69]
  %vm71 = vcmask 1047558
  %v72 = vsel %vm71, %v70, %v67
  %73 = vrot.lane.b32.xlu0 %v72, 96
  %v74 = vpop.permute.xlu0 %73
  %vm75 = vcmask 1048320
  %s76 = scalar_lea.vmem %s1, 32
  %77 = vst.msk [vmem:[%s76] ss:$-24 sm:$0x3] %vm75, %v74
  %s78 = scalar_lea.vmem %s1, 7
  %79 = vst.msk [vmem:[%s78] sm:$0xfc] %vm75, %v74
  %s80 = scalar_lea.vmem %s0, 135
  %s81 = smov 3
  %v82 = vld [vmem:[%s80] ss:$-16 sm:%s81]
  %s83 = scalar_lea.vmem %s0, 4294967275
  %s84 = smov 12
  %v85 = vld [vmem:[%s83] ss:$16 sm:%s84]
  %vm86 = vcmask 1043458
  %v87 = vsel %vm86, %v85, %v82
  %s88 = scalar_lea.vmem %s0, 4294967275
  %s89 = smov 48
  %v90 = vld [vmem:[%s88] ss:$16 sm:%s89]
  %vm91 = vcmask 1045508
  %v92 = vsel %vm91, %v90, %v87
  %s93 = scalar_lea.vmem %s0, 4294967275
  %s94 = smov 192
  %v95 = vld [vmem:[%s93] ss:$16 sm:%s94]
  %vm96 = vcmask 1047558
  %v97 = vsel %vm96, %v95, %v92
  %98 = vrot.lane.b32.xlu0 %v97, 96
  %v99 = vpop.permute.xlu0 %98
  %vm100 = vcmask 1048320
  %s101 = scalar_lea.vmem %s1, 40
  %102 = vst.msk [vmem:[%s101] ss:$-25 sm:$0x3] %vm100, %v99
  %s103 = scalar_lea.vmem %s1, 14
  %104 = vst.msk [vmem:[%s103] sm:$0xfc] %vm100, %v99
  %s105 = scalar_lea.vmem %s0, 139
  %v106 = vld [vmem:[%s105] sm:$0x1]
  %s107 = scalar_lea.vmem %s0, 91
  %s108 = smov 6
  %v109 = vld [vmem:[%s107] ss:$16 sm:%s108]
  %vm110 = vcmask 1042433
  %v111 = vsel %vm110, %v109, %v106
  %s112 = scalar_lea.vmem %s0, 4294967263
  %s113 = smov 24
  %v114 = vld [vmem:[%s112] ss:$16 sm:%s113]
  %vm115 = vcmask 1044483
  %v116 = vsel %vm115, %v114, %v111
  %s117 = scalar_lea.vmem %s0, 4294967263
  %s118 = smov 96
  %v119 = vld [vmem:[%s117] ss:$16 sm:%s118]
  %vm120 = vcmask 1046533
  %v121 = vsel %vm120, %v119, %v116
  %s122 = scalar_lea.vmem %s0, 72
  %v123 = vld [vmem:[%s122] sm:$0x80]
  %vm124 = vcmask 1047559
  %v125 = vsel %vm124, %v123, %v121
  %126 = vrot.lane.b32.xlu0 %v125, 96
  %v127 = vpop.permute.xlu0 %126
  %vm128 = vcmask 1048320
  %s129 = scalar_lea.vmem %s1, 48
  %130 = vst.msk [vmem:[%s129] ss:$-26 sm:$0x3] %vm128, %v127
  %s131 = scalar_lea.vmem %s1, 21
  %132 = vst.msk [vmem:[%s131] sm:$0xfc] %vm128, %v127
  %s133 = scalar_lea.vmem %s0, 143
  %s134 = smov 3
  %v135 = vld [vmem:[%s133] ss:$-48 sm:%s134]
  %s136 = scalar_lea.vmem %s0, 79
  %s137 = smov 12
  %v138 = vld [vmem:[%s136] ss:$16 sm:%s137]
  %vm139 = vcmask 1043458
  %v140 = vsel %vm139, %v138, %v135
  %141 = vrot.lane.b32.xlu0 %v140, 96
  %v142 = vpop.permute.xlu0 %141
  %vm143 = vcmask 1048320
  %s144 = scalar_lea.vmem %s1, 56
  %145 = vst.msk [vmem:[%s144] ss:$-27 sm:$0x3] %vm143, %v142
  %s146 = scalar_lea.vmem %s1, 28
  %147 = vst.msk [vmem:[%s146] sm:$0xc] %vm143, %v142
  %s148 = scalar_lea.vmem %s0, 2
  %s149 = smov 3
  %v150 = vld [vmem:[%s148] ss:$16 sm:%s149]
  %s151 = scalar_lea.vmem %s0, 2
  %s152 = smov 12
  %v153 = vld [vmem:[%s151] ss:$16 sm:%s152]
  %vm154 = vcmask 1043458
  %v155 = vsel %vm154, %v153, %v150
  %s156 = scalar_lea.vmem %s0, 2
  %s157 = smov 48
  %v158 = vld [vmem:[%s156] ss:$16 sm:%s157]
  %vm159 = vcmask 1045508
  %v160 = vsel %vm159, %v158, %v155
  %s161 = scalar_lea.vmem %s0, 2
  %s162 = smov 192
  %v163 = vld [vmem:[%s161] ss:$16 sm:%s162]
  %vm164 = vcmask 1047558
  %v165 = vsel %vm164, %v163, %v160
  %166 = vrot.lane.b32.xlu0 %v165, 64
  %v167 = vpop.permute.xlu0 %166
  %vm168 = vcmask 785920
  %169 = vst.msk [vmem:[%s1] sm:$0xff] %vm168, %v167
  %s170 = scalar_lea.vmem %s0, 130
  %s171 = smov 3
  %v172 = vld [vmem:[%s170] ss:$-124 sm:%s171]
  %s173 = scalar_lea.vmem %s0, 4294967286
  %s174 = smov 12
  %v175 = vld [vmem:[%s173] ss:$16 sm:%s174]
  %vm176 = vcmask 1043458
  %v177 = vsel %vm176, %v175, %v172
  %s178 = scalar_lea.vmem %s0, 4294967286
  %s179 = smov 48
  %v180 = vld [vmem:[%s178] ss:$16 sm:%s179]
  %vm181 = vcmask 1045508
  %v182 = vsel %vm181, %v180, %v177
  %s183 = scalar_lea.vmem %s0, 4294967286
  %s184 = smov 192
  %v185 = vld [vmem:[%s183] ss:$16 sm:%s184]
  %vm186 = vcmask 1047558
  %v187 = vsel %vm186, %v185, %v182
  %188 = vrot.lane.b32.xlu0 %v187, 64
  %v189 = vpop.permute.xlu0 %188
  %vm190 = vcmask 785920
  %s191 = scalar_lea.vmem %s1, 32
  %192 = vst.msk [vmem:[%s191] ss:$-24 sm:$0x3] %vm190, %v189
  %s193 = scalar_lea.vmem %s1, 7
  %194 = vst.msk [vmem:[%s193] sm:$0xfc] %vm190, %v189
  %s195 = scalar_lea.vmem %s0, 134
  %s196 = smov 3
  %v197 = vld [vmem:[%s195] ss:$-16 sm:%s196]
  %s198 = scalar_lea.vmem %s0, 4294967274
  %s199 = smov 12
  %v200 = vld [vmem:[%s198] ss:$16 sm:%s199]
  %vm201 = vcmask 1043458
  %v202 = vsel %vm201, %v200, %v197
  %s203 = scalar_lea.vmem %s0, 4294967274
  %s204 = smov 48
  %v205 = vld [vmem:[%s203] ss:$16 sm:%s204]
  %vm206 = vcmask 1045508
  %v207 = vsel %vm206, %v205, %v202
  %s208 = scalar_lea.vmem %s0, 4294967274
  %s209 = smov 192
  %v210 = vld [vmem:[%s208] ss:$16 sm:%s209]
  %vm211 = vcmask 1047558
  %v212 = vsel %vm211, %v210, %v207
  %213 = vrot.lane.b32.xlu0 %v212, 64
  %v214 = vpop.permute.xlu0 %213
  %vm215 = vcmask 785920
  %s216 = scalar_lea.vmem %s1, 40
  %217 = vst.msk [vmem:[%s216] ss:$-25 sm:$0x3] %vm215, %v214
  %s218 = scalar_lea.vmem %s1, 14
  %219 = vst.msk [vmem:[%s218] sm:$0xfc] %vm215, %v214
  %s220 = scalar_lea.vmem %s0, 138
  %v221 = vld [vmem:[%s220] sm:$0x1]
  %s222 = scalar_lea.vmem %s0, 90
  %s223 = smov 6
  %v224 = vld [vmem:[%s222] ss:$16 sm:%s223]
  %vm225 = vcmask 1042433
  %v226 = vsel %vm225, %v224, %v221
  %s227 = scalar_lea.vmem %s0, 4294967262
  %s228 = smov 24
  %v229 = vld [vmem:[%s227] ss:$16 sm:%s228]
  %vm230 = vcmask 1044483
  %v231 = vsel %vm230, %v229, %v226
  %s232 = scalar_lea.vmem %s0, 4294967262
  %s233 = smov 96
  %v234 = vld [vmem:[%s232] ss:$16 sm:%s233]
  %vm235 = vcmask 1046533
  %v236 = vsel %vm235, %v234, %v231
  %s237 = scalar_lea.vmem %s0, 71
  %v238 = vld [vmem:[%s237] sm:$0x80]
  %vm239 = vcmask 1047559
  %v240 = vsel %vm239, %v238, %v236
  %241 = vrot.lane.b32.xlu0 %v240, 64
  %v242 = vpop.permute.xlu0 %241
  %vm243 = vcmask 785920
  %s244 = scalar_lea.vmem %s1, 48
  %245 = vst.msk [vmem:[%s244] ss:$-26 sm:$0x3] %vm243, %v242
  %s246 = scalar_lea.vmem %s1, 21
  %247 = vst.msk [vmem:[%s246] sm:$0xfc] %vm243, %v242
  %s248 = scalar_lea.vmem %s0, 142
  %s249 = smov 3
  %v250 = vld [vmem:[%s248] ss:$-48 sm:%s249]
  %s251 = scalar_lea.vmem %s0, 78
  %s252 = smov 12
  %v253 = vld [vmem:[%s251] ss:$16 sm:%s252]
  %vm254 = vcmask 1043458
  %v255 = vsel %vm254, %v253, %v250
  %256 = vrot.lane.b32.xlu0 %v255, 64
  %v257 = vpop.permute.xlu0 %256
  %vm258 = vcmask 785920
  %s259 = scalar_lea.vmem %s1, 56
  %260 = vst.msk [vmem:[%s259] ss:$-27 sm:$0x3] %vm258, %v257
  %s261 = scalar_lea.vmem %s1, 28
  %262 = vst.msk [vmem:[%s261] sm:$0xc] %vm258, %v257
  %s263 = scalar_lea.vmem %s0, 1
  %s264 = smov 3
  %v265 = vld [vmem:[%s263] ss:$16 sm:%s264]
  %s266 = scalar_lea.vmem %s0, 1
  %s267 = smov 12
  %v268 = vld [vmem:[%s266] ss:$16 sm:%s267]
  %vm269 = vcmask 1043458
  %v270 = vsel %vm269, %v268, %v265
  %s271 = scalar_lea.vmem %s0, 1
  %s272 = smov 48
  %v273 = vld [vmem:[%s271] ss:$16 sm:%s272]
  %vm274 = vcmask 1045508
  %v275 = vsel %vm274, %v273, %v270
  %s276 = scalar_lea.vmem %s0, 1
  %s277 = smov 192
  %v278 = vld [vmem:[%s276] ss:$16 sm:%s277]
  %vm279 = vcmask 1047558
  %v280 = vsel %vm279, %v278, %v275
  %281 = vrot.lane.b32.xlu0 %v280, 32
  %v282 = vpop.permute.xlu0 %281
  %vm283 = vcmask 523520
  %284 = vst.msk [vmem:[%s1] sm:$0xff] %vm283, %v282
  %s285 = scalar_lea.vmem %s0, 129
  %s286 = smov 3
  %v287 = vld [vmem:[%s285] ss:$-124 sm:%s286]
  %s288 = scalar_lea.vmem %s0, 4294967285
  %s289 = smov 12
  %v290 = vld [vmem:[%s288] ss:$16 sm:%s289]
  %vm291 = vcmask 1043458
  %v292 = vsel %vm291, %v290, %v287
  %s293 = scalar_lea.vmem %s0, 4294967285
  %s294 = smov 48
  %v295 = vld [vmem:[%s293] ss:$16 sm:%s294]
  %vm296 = vcmask 1045508
  %v297 = vsel %vm296, %v295, %v292
  %s298 = scalar_lea.vmem %s0, 4294967285
  %s299 = smov 192
  %v300 = vld [vmem:[%s298] ss:$16 sm:%s299]
  %vm301 = vcmask 1047558
  %v302 = vsel %vm301, %v300, %v297
  %303 = vrot.lane.b32.xlu0 %v302, 32
  %v304 = vpop.permute.xlu0 %303
  %vm305 = vcmask 523520
  %s306 = scalar_lea.vmem %s1, 32
  %307 = vst.msk [vmem:[%s306] ss:$-24 sm:$0x3] %vm305, %v304
  %s308 = scalar_lea.vmem %s1, 7
  %309 = vst.msk [vmem:[%s308] sm:$0xfc] %vm305, %v304
  %s310 = scalar_lea.vmem %s0, 133
  %s311 = smov 3
  %v312 = vld [vmem:[%s310] ss:$-16 sm:%s311]
  %s313 = scalar_lea.vmem %s0, 4294967273
  %s314 = smov 12
  %v315 = vld [vmem:[%s313] ss:$16 sm:%s314]
  %vm316 = vcmask 1043458
  %v317 = vsel %vm316, %v315, %v312
  %s318 = scalar_lea.vmem %s0, 4294967273
  %s319 = smov 48
  %v320 = vld [vmem:[%s318] ss:$16 sm:%s319]
  %vm321 = vcmask 1045508
  %v322 = vsel %vm321, %v320, %v317
  %s323 = scalar_lea.vmem %s0, 4294967273
  %s324 = smov 192
  %v325 = vld [vmem:[%s323] ss:$16 sm:%s324]
  %vm326 = vcmask 1047558
  %v327 = vsel %vm326, %v325, %v322
  %328 = vrot.lane.b32.xlu0 %v327, 32
  %v329 = vpop.permute.xlu0 %328
  %vm330 = vcmask 523520
  %s331 = scalar_lea.vmem %s1, 40
  %332 = vst.msk [vmem:[%s331] ss:$-25 sm:$0x3] %vm330, %v329
  %s333 = scalar_lea.vmem %s1, 14
  %334 = vst.msk [vmem:[%s333] sm:$0xfc] %vm330, %v329
  %s335 = scalar_lea.vmem %s0, 137
  %v336 = vld [vmem:[%s335] sm:$0x1]
  %s337 = scalar_lea.vmem %s0, 89
  %s338 = smov 6
  %v339 = vld [vmem:[%s337] ss:$16 sm:%s338]
  %vm340 = vcmask 1042433
  %v341 = vsel %vm340, %v339, %v336
  %s342 = scalar_lea.vmem %s0, 4294967261
  %s343 = smov 24
  %v344 = vld [vmem:[%s342] ss:$16 sm:%s343]
  %vm345 = vcmask 1044483
  %v346 = vsel %vm345, %v344, %v341
  %s347 = scalar_lea.vmem %s0, 4294967261
  %s348 = smov 96
  %v349 = vld [vmem:[%s347] ss:$16 sm:%s348]
  %vm350 = vcmask 1046533
  %v351 = vsel %vm350, %v349, %v346
  %s352 = scalar_lea.vmem %s0, 70
  %v353 = vld [vmem:[%s352] sm:$0x80]
  %vm354 = vcmask 1047559
  %v355 = vsel %vm354, %v353, %v351
  %356 = vrot.lane.b32.xlu0 %v355, 32
  %v357 = vpop.permute.xlu0 %356
  %vm358 = vcmask 523520
  %s359 = scalar_lea.vmem %s1, 48
  %360 = vst.msk [vmem:[%s359] ss:$-26 sm:$0x3] %vm358, %v357
  %s361 = scalar_lea.vmem %s1, 21
  %362 = vst.msk [vmem:[%s361] sm:$0xfc] %vm358, %v357
  %s363 = scalar_lea.vmem %s0, 141
  %s364 = smov 3
  %v365 = vld [vmem:[%s363] ss:$-48 sm:%s364]
  %s366 = scalar_lea.vmem %s0, 77
  %s367 = smov 12
  %v368 = vld [vmem:[%s366] ss:$16 sm:%s367]
  %vm369 = vcmask 1043458
  %v370 = vsel %vm369, %v368, %v365
  %371 = vrot.lane.b32.xlu0 %v370, 32
  %v372 = vpop.permute.xlu0 %371
  %vm373 = vcmask 523520
  %s374 = scalar_lea.vmem %s1, 56
  %375 = vst.msk [vmem:[%s374] ss:$-27 sm:$0x3] %vm373, %v372
  %s376 = scalar_lea.vmem %s1, 28
  %377 = vst.msk [vmem:[%s376] sm:$0xc] %vm373, %v372

// kernel: bsconvu_forward.1
$region0: #{bsconvu_forward.1}
  #allocation0 [shape = 'u32[]', space=smem, size = 0x4, offset = 0x4, fixed_abs, tag = 'smem constant byte address 0x4 - core index']
  #allocation1 [shape = 'u32[72,128]{1,0:T(1,128)}', space=vmem, size = 0x9000, scoped, tag = 'internal scratch']
  %s0 = inlined_call_operand.vmem [shape: f32[2,18,72], index: 0, kind: input, shape index: {}]
  %s1 = inlined_call_operand.vmem [shape: f32[72,576], index: 1, kind: input, shape index: {}]
  %s2 = inlined_call_operand.vmem [shape: f32[9,512], index: 2, kind: input, shape index: {}]
  %s3 = inlined_call_operand.vmem [shape: f32[1,512], index: 3, kind: input, shape index: {}]
  %s4 = inlined_call_operand.vmem [shape: f32[2,16,512], index: 4, kind: output, shape index: {}]
  %s5 = sld [smem:[#allocation0]]
  $region49: #{bsconvu_forward.1} parent=0
    _
  %s7 = ssub.s32 1, %s5
  %s8 = scalar_select 0, %s7, %s5
  loop: start=0, step=1, limit=4
  $region2: #{bsconvu_forward.1} parent=0 // loop_pre_header
    _
  $region3: #{bsconvu_forward.1} parent=0 // loop_header
    %s10 = sphi 0, %s14
    %p11 = scmp.ge.s32.totalorder %s10, 4
    %s20 = sphi 0, %s22
    %s23 = sphi 0, %s20
    %s24 = sphi 0, %s23
    %s40 = sphi 0, %s24
    %s44 = sphi 0, %s44
    %s46 = sphi 0, %s44
    %s47 = sphi 0, %s46
    %s61 = sphi 0, %s47
    %s65 = sphi 0, %s65
    %s67 = sphi 0, %s65
    %s68 = sphi 0, %s67
    %s82 = sphi 0, %s68
    %s86 = sphi 0, %s86
    %s88 = sphi 0, %s86
    %s89 = sphi 0, %s88
    %s103 = sphi 0, %s89
    %s109 = sphi 0, %s111
    %s112 = sphi 0, %s109
    %s113 = sphi 0, %s112
    %s129 = sphi 0, %s113
  $region4: #{bsconvu_forward.1} parent=0 // loop_header_branch
    %13 = sbr.rel (%p11) target = $region8
  $region5: #{bsconvu_forward.1} parent=0 // loop_body
    %s15 = ssub.s32 %s10, 1
    %s16 = ssub.s32 %s10, 2
    %s17 = sadd.s32 %s10, 1
    %s18 = ssub.s32 %s10, %s17
    %p19 = scmp.eq.s32.totalorder %s18, 0
    %s21 = sadd.s32 %s20, 1
    %s22 = scalar_select %p19, %s20, %s21
    %p25 = pneg %p19
    %p26 = scmp.eq.s32.totalorder %s10, 1
    %p27 = por %p25, %p26
    %p28 = scmp.ne.s32.totalorder %s20, %s23
    %p29 = scmp.eq.s32.totalorder %s10, 0
    %p30 = por %p28, %p29
    %p31 = scmp.ne.s32.totalorder %s20, %s23
    %p32 = scmp.eq.s32.totalorder %s15, 1
    %p33 = por %p31, %p32
    %p34 = scmp.ne.s32.totalorder %s23, %s24
    %p35 = scmp.eq.s32.totalorder %s15, 0
    %p36 = por %p34, %p35
    %p37 = scmp.ne.s32.totalorder %s23, %s24
    %p38 = scmp.eq.s32.totalorder %s16, 1
    %p39 = por %p37, %p38
    %p41 = scmp.ne.s32.totalorder %s24, %s40
    %p42 = scmp.eq.s32.totalorder %s16, 0
    %p43 = por %p41, %p42
    %s45 = sadd.s32 %s44, 1
    %p48 = scmp.eq.s32.totalorder %s10, 1
    %p49 = scmp.ne.s32.totalorder %s44, %s46
    %p50 = scmp.eq.s32.totalorder %s10, 0
    %p51 = por %p49, %p50
    %p52 = scmp.ne.s32.totalorder %s44, %s46
    %p53 = scmp.eq.s32.totalorder %s15, 1
    %p54 = por %p52, %p53
    %p55 = scmp.ne.s32.totalorder %s46, %s47
    %p56 = scmp.eq.s32.totalorder %s15, 0
    %p57 = por %p55, %p56
    %p58 = scmp.ne.s32.totalorder %s46, %s47
    %p59 = scmp.eq.s32.totalorder %s16, 1
    %p60 = por %p58, %p59
    %p62 = scmp.ne.s32.totalorder %s47, %s61
    %p63 = scmp.eq.s32.totalorder %s16, 0
    %p64 = por %p62, %p63
    %s66 = sadd.s32 %s65, 1
    %p69 = scmp.eq.s32.totalorder %s10, 1
    %p70 = scmp.ne.s32.totalorder %s65, %s67
    %p71 = scmp.eq.s32.totalorder %s10, 0
    %p72 = por %p70, %p71
    %p73 = scmp.ne.s32.totalorder %s65, %s67
    %p74 = scmp.eq.s32.totalorder %s15, 1
    %p75 = por %p73, %p74
    %p76 = scmp.ne.s32.totalorder %s67, %s68
    %p77 = scmp.eq.s32.totalorder %s15, 0
    %p78 = por %p76, %p77
    %p79 = scmp.ne.s32.totalorder %s67, %s68
    %p80 = scmp.eq.s32.totalorder %s16, 1
    %p81 = por %p79, %p80
    %p83 = scmp.ne.s32.totalorder %s68, %s82
    %p84 = scmp.eq.s32.totalorder %s16, 0
    %p85 = por %p83, %p84
    %s87 = sadd.s32 %s86, 1
    %p90 = scmp.eq.s32.totalorder %s10, 1
    %p91 = scmp.ne.s32.totalorder %s86, %s88
    %p92 = scmp.eq.s32.totalorder %s10, 0
    %p93 = por %p91, %p92
    %p94 = scmp.ne.s32.totalorder %s86, %s88
    %p95 = scmp.eq.s32.totalorder %s15, 1
    %p96 = por %p94, %p95
    %p97 = scmp.ne.s32.totalorder %s88, %s89
    %p98 = scmp.eq.s32.totalorder %s15, 0
    %p99 = por %p97, %p98
    %p100 = scmp.ne.s32.totalorder %s88, %s89
    %p101 = scmp.eq.s32.totalorder %s16, 1
    %p102 = por %p100, %p101
    %p104 = scmp.ne.s32.totalorder %s89, %s103
    %p105 = scmp.eq.s32.totalorder %s16, 0
    %p106 = por %p104, %p105
    %s107 = ssub.s32 %s10, %s17
    %p108 = scmp.eq.s32.totalorder %s107, 0
    %s110 = sadd.s32 %s109, 1
    %s111 = scalar_select %p108, %s109, %s110
    %p114 = pneg %p108
    %p115 = scmp.eq.s32.totalorder %s10, 1
    %p116 = por %p114, %p115
    %p117 = scmp.ne.s32.totalorder %s109, %s112
    %p118 = scmp.eq.s32.totalorder %s10, 0
    %p119 = por %p117, %p118
    %p120 = scmp.ne.s32.totalorder %s109, %s112
    %p121 = scmp.eq.s32.totalorder %s15, 1
    %p122 = por %p120, %p121
    %p123 = scmp.ne.s32.totalorder %s112, %s113
    %p124 = scmp.eq.s32.totalorder %s15, 0
    %p125 = por %p123, %p124
    %p126 = scmp.ne.s32.totalorder %s112, %s113
    %p127 = scmp.eq.s32.totalorder %s16, 1
    %p128 = por %p126, %p127
    %p130 = scmp.ne.s32.totalorder %s113, %s129
    %p131 = scmp.eq.s32.totalorder %s16, 0
    %p132 = por %p130, %p131
    %p133 = scmp.le.s32.totalorder 1, %s10
    %p134 = scmp.lt.s32.totalorder %s10, 3
    %p135 = pnand %p133, %p134
    %p136 = pneg %p135
    // Predicated region
    $region9: #{bsconvu_forward.1} parent=5 // pred_check
      _
    $region10: #{bsconvu_forward.1} parent=5 // pred_check_branch
      %138 = sbr.rel (%p135) target = $region12
    $region11: #{bsconvu_forward.1} parent=5 // pred_region
      %s139 = ssub.s32 %s10, 1
      // Predicated region
      $region13: #{bsconvu_forward.1} parent=11 // pred_check
        %p140 = pneg %p57
      $region14: #{bsconvu_forward.1} parent=11 // pred_check_branch
        %142 = sbr.rel (%p140) target = $region16
      $region15: #{bsconvu_forward.1} parent=11 // pred_region
        _
      $region16: #{bsconvu_forward.1} parent=11 // pred_fallthru
        _
      // Predicated region
      $region17: #{bsconvu_forward.1} parent=11 // pred_check
        %p143 = pneg %p78
      $region18: #{bsconvu_forward.1} parent=11 // pred_check_branch
        %145 = sbr.rel (%p143) target = $region20
      $region19: #{bsconvu_forward.1} parent=11 // pred_region
        _
      $region20: #{bsconvu_forward.1} parent=11 // pred_fallthru
        _
      // Predicated region
      $region21: #{bsconvu_forward.1} parent=11 // pred_check
        %p146 = pneg %p99
      $region22: #{bsconvu_forward.1} parent=11 // pred_check_branch
        %148 = sbr.rel (%p146) target = $region24
      $region23: #{bsconvu_forward.1} parent=11 // pred_region
        _
      $region24: #{bsconvu_forward.1} parent=11 // pred_fallthru
        _
    $region12: #{bsconvu_forward.1} parent=5 // pred_fallthru
      _
    %p149 = scmp.lt.s32.totalorder %s10, 2
    // Predicated region
    $region25: #{bsconvu_forward.1} parent=5 // pred_check
      %p150 = pneg %p149
    $region26: #{bsconvu_forward.1} parent=5 // pred_check_branch
      %152 = sbr.rel (%p150) target = $region28
    $region27: #{bsconvu_forward.1} parent=5 // pred_region
      // Predicated region
      $region29: #{bsconvu_forward.1} parent=27 // pred_check
        %p153 = pneg %p30
      $region30: #{bsconvu_forward.1} parent=27 // pred_check_branch
        %155 = sbr.rel (%p153) target = $region32
      $region31: #{bsconvu_forward.1} parent=27 // pred_region
        %p156 = scmp.lt.s32.totalorder %s10, 1
        %s157 = scalar_select %p156, %s10, 1
        %s158 = smul.addr %s157, 3
        %s159 = smul.addr %s158, 8
        %s160 = scalar_lea.vmem %s0, %s159
      $region32: #{bsconvu_forward.1} parent=27 // pred_fallthru
        _
    $region28: #{bsconvu_forward.1} parent=5 // pred_fallthru
      _
    %p161 = scmp.le.s32.totalorder 1, %s10
    %p162 = scmp.lt.s32.totalorder %s10, 3
    %p163 = pnand %p161, %p162
    %p164 = pneg %p163
    // Predicated region
    $region33: #{bsconvu_forward.1} parent=5 // pred_check
      _
    $region34: #{bsconvu_forward.1} parent=5 // pred_check_branch
      %166 = sbr.rel (%p163) target = $region36
    $region35: #{bsconvu_forward.1} parent=5 // pred_region
      %s167 = ssub.s32 %s10, 1
      %p168 = scmp.lt.s32.totalorder %s15, 1
      %s169 = scalar_select %p168, %s15, 1
      %s170 = smul.addr %s169, 3
      %s171 = smul.addr %s170, 8
      %s172 = scalar_lea.vmem %s0, %s171
      %p173 = pneg %p36
      %p174 = pneg %p33
      %p175 = pneg %p57
      %p176 = pneg %p54
      %p177 = pneg %p78
      %p178 = pneg %p75
      %p179 = pneg %p99
      %p180 = pneg %p96
      %p181 = pneg %p125
      %p182 = pneg %p122
      %p183 = scmp.lt.s32.totalorder %s15, 1
      %s184 = scalar_select %p183, %s15, 1
      %s185 = smul.addr %s184, 8
      %s186 = smul.addr %s185, 8
      %s187 = scalar_lea.vmem %s4, %s186
      %p188 = scmp.lt.s32.totalorder %s15, 1
      %s189 = scalar_select %p188, %s15, 1
      %s190 = smul.addr %s189, 3
      %s191 = smul.addr %s190, 8
      %s192 = scalar_lea.vmem %s0, %s191
      %p193 = scmp.lt.s32.totalorder %s15, 1
      %s194 = scalar_select %p193, %s15, 1
      %s195 = smul.addr %s194, 8
      %s196 = smul.addr %s195, 8
      %s197 = scalar_lea.vmem %s4, %s196
      %v198 = vld [vmem:[%s192] sm:$0xff]
      %v199 = vld [vmem:[%s192 + $0x8] sm:$0xff]
      %v200 = vld [vmem:[%s192 + $0x10] sm:$0x3]
      %v201 = vld [vmem:[%s1] sm:$0xff]
      %v202 = vld [vmem:[%s1 + $0x8] sm:$0xff]
      %v203 = vld [vmem:[%s1 + $0x10] sm:$0xff]
      %v204 = vld [vmem:[%s1 + $0x18] sm:$0xff]
      %v205 = vld [vmem:[%s1 + $0x20] sm:$0xff]
      %v206 = vld [vmem:[%s1 + $0x28] sm:$0xff]
      %v207 = vld [vmem:[%s1 + $0x30] sm:$0xff]
      %v208 = vld [vmem:[%s1 + $0x38] sm:$0xff]
      %v209 = vld [vmem:[%s1 + $0x40] sm:$0xff]
      %v210 = vld [vmem:[%s1 + $0x48] sm:$0xff]
      %v211 = vld [vmem:[%s1 + $0x50] sm:$0xff]
      %v212 = vld [vmem:[%s1 + $0x58] sm:$0xff]
      %v213 = vld [vmem:[%s1 + $0x60] sm:$0xff]
      %v214 = vld [vmem:[%s1 + $0x68] sm:$0xff]
      %v215 = vld [vmem:[%s1 + $0x70] sm:$0xff]
      %v216 = vld [vmem:[%s1 + $0x78] sm:$0xff]
      %v217 = vld [vmem:[%s1 + $0x80] sm:$0xff]
      %v218 = vld [vmem:[%s1 + $0x88] sm:$0xff]
      %v219 = vld [vmem:[%s1 + $0x90] sm:$0xff]
      %v220 = vld [vmem:[%s1 + $0x98] sm:$0xff]
      %v221 = vld [vmem:[%s1 + $0xa0] sm:$0xff]
      %v222 = vld [vmem:[%s1 + $0xa8] sm:$0xff]
      %v223 = vld [vmem:[%s1 + $0xb0] sm:$0xff]
      %v224 = vld [vmem:[%s1 + $0xb8] sm:$0xff]
      %v225 = vld [vmem:[%s1 + $0xc0] sm:$0xff]
      %v226 = vld [vmem:[%s1 + $0xc8] sm:$0xff]
      %v227 = vld [vmem:[%s1 + $0xd0] sm:$0xff]
      %v228 = vld [vmem:[%s1 + $0xd8] sm:$0xff]
      %v229 = vld [vmem:[%s1 + $0xe0] sm:$0xff]
      %v230 = vld [vmem:[%s1 + $0xe8] sm:$0xff]
      %v231 = vld [vmem:[%s1 + $0xf0] sm:$0xff]
      %v232 = vld [vmem:[%s1 + $0xf8] sm:$0xff]
      %v233 = vld [vmem:[%s1 + $0x100] sm:$0xff]
      %v234 = vld [vmem:[%s1 + $0x108] sm:$0xff]
      %v235 = vld [vmem:[%s1 + $0x110] sm:$0xff]
      %v236 = vld [vmem:[%s1 + $0x118] sm:$0xff]
      %v237 = vld [vmem:[%s1 + $0x120] sm:$0xff]
      %v238 = vld [vmem:[%s1 + $0x128] sm:$0xff]
      %v239 = vld [vmem:[%s1 + $0x130] sm:$0xff]
      %v240 = vld [vmem:[%s1 + $0x138] sm:$0xff]
      %v241 = vld [vmem:[%s1 + $0x140] sm:$0xff]
      %v242 = vld [vmem:[%s1 + $0x148] sm:$0xff]
      %v243 = vld [vmem:[%s1 + $0x150] sm:$0xff]
      %v244 = vld [vmem:[%s1 + $0x158] sm:$0xff]
      %v245 = vld [vmem:[%s1 + $0x160] sm:$0xff]
      %vm246 = vcmask 588800
      %v248 = vsel %vm246, %v198, 0
      %v251 = vsel %vm246, %v199, 0
      %v254 = vsel %vm246, %v200, 0
      %256 = vmatpush.msra.mxu0 0.0
      %257 = vmatpush.msra.mxu0 0.0
      %258 = vmatpush.msra.mxu0 0.0
      %259 = vmatpush.msra.mxu0 0.0
      %260 = vmatpush.msra.mxu0 0.0
      %261 = vmatpush.msra.mxu0 0.0
      %262 = vmatpush.msra.mxu0 0.0
      %v263 = vand.u32 %v241, 4294901760
      %264 = vmatpush.msra.mxu0 %v263
      %v265 = vand.u32 %v236, 4294901760
      %266 = vmatpush.msra.mxu0 %v265
      %v267 = vand.u32 %v231, 4294901760
      %268 = vmatpush.msra.mxu0 %v267
      %v269 = vand.u32 %v226, 4294901760
      %270 = vmatpush.msra.mxu0 %v269
      %v271 = vand.u32 %v221, 4294901760
      %272 = vmatpush.msra.mxu0 %v271
      %v273 = vand.u32 %v216, 4294901760
      %274 = vmatpush.msra.mxu0 %v273
      %v275 = vand.u32 %v211, 4294901760
      %276 = vmatpush.msra.mxu0 %v275
      %v277 = vand.u32 %v206, 4294901760
      %278 = vmatpush.msra.mxu0 %v277
      %v279 = vand.u32 %v201, 4294901760
      %280 = vmatpush.msra.mxu0 %v279
      %v281 = vand.u32 %v248, 4294901760
      %v282 = vsub.f32 %v248, %v281
      %v283 = vand.u32 %v282, 4294901760
      %v284 = vsub.f32 %v282, %v283
      %v285 = vand.u32 %v284, 4294901760
      %286 = vmatmul.f32.gmra.mxu0 %v285
      %v287 = vpop.f32.mrf.mxu0
      %v288 = vadd.f32 0.0, %v287
      %v289 = vand.u32 %v251, 4294901760
      %v290 = vsub.f32 %v251, %v289
      %v291 = vand.u32 %v290, 4294901760
      %v292 = vsub.f32 %v290, %v291
      %v293 = vand.u32 %v292, 4294901760
      %294 = vmatmul.f32.gmra.mxu0 %v293
      %v295 = vpop.f32.mrf.mxu0
      %v296 = vadd.f32 0.0, %v295
      %v297 = vand.u32 %v254, 4294901760
      %v298 = vsub.f32 %v254, %v297
      %v299 = vand.u32 %v298, 4294901760
      %v300 = vsub.f32 %v298, %v299
      %v301 = vand.u32 %v300, 4294901760
      %302 = vmatmul.f32.gmra.mxu0 %v301
      %v303 = vpop.f32.mrf.mxu0
      %v304 = vadd.f32 0.0, %v303
      %305 = vdwg.mxu0
      %306 = vmatpush.msra.mxu0 0.0
      %307 = vmatpush.msra.mxu0 0.0
      %308 = vmatpush.msra.mxu0 0.0
      %309 = vmatpush.msra.mxu0 0.0
      %310 = vmatpush.msra.mxu0 0.0
      %311 = vmatpush.msra.mxu0 0.0
      %312 = vmatpush.msra.mxu0 0.0
      %v313 = vand.u32 %v241, 4294901760
      %v314 = vsub.f32 %v241, %v313
      %v315 = vand.u32 %v314, 4294901760
      %v316 = vsub.f32 %v314, %v315
      %v317 = vand.u32 %v316, 4294901760
      %318 = vmatpush.msra.mxu0 %v317
      %v319 = vand.u32 %v236, 4294901760
      %v320 = vsub.f32 %v236, %v319
      %v321 = vand.u32 %v320, 4294901760
      %v322 = vsub.f32 %v320, %v321
      %v323 = vand.u32 %v322, 4294901760
      %324 = vmatpush.msra.mxu0 %v323
      %v325 = vand.u32 %v231, 4294901760
      %v326 = vsub.f32 %v231, %v325
      %v327 = vand.u32 %v326, 4294901760
      %v328 = vsub.f32 %v326, %v327
      %v329 = vand.u32 %v328, 4294901760
      %330 = vmatpush.msra.mxu0 %v329
      %v331 = vand.u32 %v226, 4294901760
      %v332 = vsub.f32 %v226, %v331
      %v333 = vand.u32 %v332, 4294901760
      %v334 = vsub.f32 %v332, %v333
      %v335 = vand.u32 %v334, 4294901760
      %336 = vmatpush.msra.mxu0 %v335
      %v337 = vand.u32 %v221, 4294901760
      %v338 = vsub.f32 %v221, %v337
      %v339 = vand.u32 %v338, 4294901760
      %v340 = vsub.f32 %v338, %v339
      %v341 = vand.u32 %v340, 4294901760
      %342 = vmatpush.msra.mxu0 %v341
      %v343 = vand.u32 %v216, 4294901760
      %v344 = vsub.f32 %v216, %v343
      %v345 = vand.u32 %v344, 4294901760
      %v346 = vsub.f32 %v344, %v345
      %v347 = vand.u32 %v346, 4294901760
      %348 = vmatpush.msra.mxu0 %v347
      %v349 = vand.u32 %v211, 4294901760
      %v350 = vsub.f32 %v211, %v349
      %v351 = vand.u32 %v350, 4294901760
      %v352 = vsub.f32 %v350, %v351
      %v353 = vand.u32 %v352, 4294901760
      %354 = vmatpush.msra.mxu0 %v353
      %v355 = vand.u32 %v206, 4294901760
      %v356 = vsub.f32 %v206, %v355
      %v357 = vand.u32 %v356, 4294901760
      %v358 = vsub.f32 %v356, %v357
      %v359 = vand.u32 %v358, 4294901760
      %360 = vmatpush.msra.mxu0 %v359
      %v361 = vand.u32 %v201, 4294901760
      %v362 = vsub.f32 %v201, %v361
      %v363 = vand.u32 %v362, 4294901760
      %v364 = vsub.f32 %v362, %v363
      %v365 = vand.u32 %v364, 4294901760
      %366 = vmatpush.msra.mxu0 %v365
      %v367 = vand.u32 %v248, 4294901760
      %368 = vmatmul.f32.gmra.mxu0 %v367
      %v369 = vpop.f32.mrf.mxu0
      %v370 = vadd.f32 %v288, %v369
      %v371 = vand.u32 %v251, 4294901760
      %372 = vmatmul.f32.gmra.mxu0 %v371
      %v373 = vpop.f32.mrf.mxu0
      %v374 = vadd.f32 %v296, %v373
      %v375 = vand.u32 %v254, 4294901760
      %376 = vmatmul.f32.gmra.mxu0 %v375
      %v377 = vpop.f32.mrf.mxu0
      %v378 = vadd.f32 %v304, %v377
      %379 = vdwg.mxu0
      %380 = vmatpush.msra.mxu0 0.0
      %381 = vmatpush.msra.mxu0 0.0
      %382 = vmatpush.msra.mxu0 0.0
      %383 = vmatpush.msra.mxu0 0.0
      %384 = vmatpush.msra.mxu0 0.0
      %385 = vmatpush.msra.mxu0 0.0
      %386 = vmatpush.msra.mxu0 0.0
      %v387 = vand.u32 %v241, 4294901760
      %v388 = vsub.f32 %v241, %v387
      %389 = vmatpush.msra.mxu0 %v388
      %v390 = vand.u32 %v236, 4294901760
      %v391 = vsub.f32 %v236, %v390
      %392 = vmatpush.msra.mxu0 %v391
      %v393 = vand.u32 %v231, 4294901760
      %v394 = vsub.f32 %v231, %v393
      %395 = vmatpush.msra.mxu0 %v394
      %v396 = vand.u32 %v226, 4294901760
      %v397 = vsub.f32 %v226, %v396
      %398 = vmatpush.msra.mxu0 %v397
      %v399 = vand.u32 %v221, 4294901760
      %v400 = vsub.f32 %v221, %v399
      %401 = vmatpush.msra.mxu0 %v400
      %v402 = vand.u32 %v216, 4294901760
      %v403 = vsub.f32 %v216, %v402
      %404 = vmatpush.msra.mxu0 %v403
      %v405 = vand.u32 %v211, 4294901760
      %v406 = vsub.f32 %v211, %v405
      %407 = vmatpush.msra.mxu0 %v406
      %v408 = vand.u32 %v206, 4294901760
      %v409 = vsub.f32 %v206, %v408
      %410 = vmatpush.msra.mxu0 %v409
      %v411 = vand.u32 %v201, 4294901760
      %v412 = vsub.f32 %v201, %v411
      %413 = vmatpush.msra.mxu0 %v412
      %v414 = vand.u32 %v248, 4294901760
      %v415 = vsub.f32 %v248, %v414
      %416 = vmatmul.f32.gmra.mxu0 %v415
      %v417 = vpop.f32.mrf.mxu0
      %v418 = vadd.f32 %v370, %v417
      %v419 = vand.u32 %v251, 4294901760
      %v420 = vsub.f32 %v251, %v419
      %421 = vmatmul.f32.gmra.mxu0 %v420
      %v422 = vpop.f32.mrf.mxu0
      %v423 = vadd.f32 %v374, %v422
      %v424 = vand.u32 %v254, 4294901760
      %v425 = vsub.f32 %v254, %v424
      %426 = vmatmul.f32.gmra.mxu0 %v425
      %v427 = vpop.f32.mrf.mxu0
      %v428 = vadd.f32 %v378, %v427
      %429 = vdwg.mxu0
      %430 = vmatpush.msra.mxu0 0.0
      %431 = vmatpush.msra.mxu0 0.0
      %432 = vmatpush.msra.mxu0 0.0
      %433 = vmatpush.msra.mxu0 0.0
      %434 = vmatpush.msra.mxu0 0.0
      %435 = vmatpush.msra.mxu0 0.0
      %436 = vmatpush.msra.mxu0 0.0
      %v437 = vand.u32 %v241, 4294901760
      %438 = vmatpush.msra.mxu0 %v437
      %v439 = vand.u32 %v236, 4294901760
      %440 = vmatpush.msra.mxu0 %v439
      %v441 = vand.u32 %v231, 4294901760
      %442 = vmatpush.msra.mxu0 %v441
      %v443 = vand.u32 %v226, 4294901760
      %444 = vmatpush.msra.mxu0 %v443
      %v445 = vand.u32 %v221, 4294901760
      %446 = vmatpush.msra.mxu0 %v445
      %v447 = vand.u32 %v216, 4294901760
      %448 = vmatpush.msra.mxu0 %v447
      %v449 = vand.u32 %v211, 4294901760
      %450 = vmatpush.msra.mxu0 %v449
      %v451 = vand.u32 %v206, 4294901760
      %452 = vmatpush.msra.mxu0 %v451
      %v453 = vand.u32 %v201, 4294901760
      %454 = vmatpush.msra.mxu0 %v453
      %v455 = vand.u32 %v248, 4294901760
      %v456 = vsub.f32 %v248, %v455
      %v457 = vand.u32 %v456, 4294901760
      %458 = vmatmul.f32.gmra.mxu0 %v457
      %v459 = vpop.f32.mrf.mxu0
      %v460 = vadd.f32 %v418, %v459
      %v461 = vand.u32 %v251, 4294901760
      %v462 = vsub.f32 %v251, %v461
      %v463 = vand.u32 %v462, 4294901760
      %464 = vmatmul.f32.gmra.mxu0 %v463
      %v465 = vpop.f32.mrf.mxu0
      %v466 = vadd.f32 %v423, %v465
      %v467 = vand.u32 %v254, 4294901760
      %v468 = vsub.f32 %v254, %v467
      %v469 = vand.u32 %v468, 4294901760
      %470 = vmatmul.f32.gmra.mxu0 %v469
      %v471 = vpop.f32.mrf.mxu0
      %v472 = vadd.f32 %v428, %v471
      %473 = vdwg.mxu0
      %474 = vmatpush.msra.mxu0 0.0
      %475 = vmatpush.msra.mxu0 0.0
      %476 = vmatpush.msra.mxu0 0.0
      %477 = vmatpush.msra.mxu0 0.0
      %478 = vmatpush.msra.mxu0 0.0
      %479 = vmatpush.msra.mxu0 0.0
      %480 = vmatpush.msra.mxu0 0.0
      %v481 = vand.u32 %v241, 4294901760
      %v482 = vsub.f32 %v241, %v481
      %v483 = vand.u32 %v482, 4294901760
      %484 = vmatpush.msra.mxu0 %v483
      %v485 = vand.u32 %v236, 4294901760
      %v486 = vsub.f32 %v236, %v485
      %v487 = vand.u32 %v486, 4294901760
      %488 = vmatpush.msra.mxu0 %v487
      %v489 = vand.u32 %v231, 4294901760
      %v490 = vsub.f32 %v231, %v489
      %v491 = vand.u32 %v490, 4294901760
      %492 = vmatpush.msra.mxu0 %v491
      %v493 = vand.u32 %v226, 4294901760
      %v494 = vsub.f32 %v226, %v493
      %v495 = vand.u32 %v494, 4294901760
      %496 = vmatpush.msra.mxu0 %v495
      %v497 = vand.u32 %v221, 4294901760
      %v498 = vsub.f32 %v221, %v497
      %v499 = vand.u32 %v498, 4294901760
      %500 = vmatpush.msra.mxu0 %v499
      %v501 = vand.u32 %v216, 4294901760
      %v502 = vsub.f32 %v216, %v501
      %v503 = vand.u32 %v502, 4294901760
      %504 = vmatpush.msra.mxu0 %v503
      %v505 = vand.u32 %v211, 4294901760
      %v506 = vsub.f32 %v211, %v505
      %v507 = vand.u32 %v506, 4294901760
      %508 = vmatpush.msra.mxu0 %v507
      %v509 = vand.u32 %v206, 4294901760
      %v510 = vsub.f32 %v206, %v509
      %v511 = vand.u32 %v510, 4294901760
      %512 = vmatpush.msra.mxu0 %v511
      %v513 = vand.u32 %v201, 4294901760
      %v514 = vsub.f32 %v201, %v513
      %v515 = vand.u32 %v514, 4294901760
      %516 = vmatpush.msra.mxu0 %v515
      %v517 = vand.u32 %v248, 4294901760
      %518 = vmatmul.f32.gmra.mxu0 %v517
      %v519 = vpop.f32.mrf.mxu0
      %v520 = vadd.f32 %v460, %v519
      %v521 = vand.u32 %v251, 4294901760
      %522 = vmatmul.f32.gmra.mxu0 %v521
      %v523 = vpop.f32.mrf.mxu0
      %v524 = vadd.f32 %v466, %v523
      %v525 = vand.u32 %v254, 4294901760
      %526 = vmatmul.f32.gmra.mxu0 %v525
      %v527 = vpop.f32.mrf.mxu0
      %v528 = vadd.f32 %v472, %v527
      %529 = vdwg.mxu0
      %530 = vmatpush.msra.mxu0 0.0
      %531 = vmatpush.msra.mxu0 0.0
      %532 = vmatpush.msra.mxu0 0.0
      %533 = vmatpush.msra.mxu0 0.0
      %534 = vmatpush.msra.mxu0 0.0
      %535 = vmatpush.msra.mxu0 0.0
      %536 = vmatpush.msra.mxu0 0.0
      %v537 = vand.u32 %v241, 4294901760
      %538 = vmatpush.msra.mxu0 %v537
      %v539 = vand.u32 %v236, 4294901760
      %540 = vmatpush.msra.mxu0 %v539
      %v541 = vand.u32 %v231, 4294901760
      %542 = vmatpush.msra.mxu0 %v541
      %v543 = vand.u32 %v226, 4294901760
      %544 = vmatpush.msra.mxu0 %v543
      %v545 = vand.u32 %v221, 4294901760
      %546 = vmatpush.msra.mxu0 %v545
      %v547 = vand.u32 %v216, 4294901760
      %548 = vmatpush.msra.mxu0 %v547
      %v549 = vand.u32 %v211, 4294901760
      %550 = vmatpush.msra.mxu0 %v549
      %v551 = vand.u32 %v206, 4294901760
      %552 = vmatpush.msra.mxu0 %v551
      %v553 = vand.u32 %v201, 4294901760
      %554 = vmatpush.msra.mxu0 %v553
      %v555 = vand.u32 %v248, 4294901760
      %556 = vmatmul.f32.gmra.mxu0 %v555
      %v557 = vpop.f32.mrf.mxu0
      %v558 = vadd.f32 %v520, %v557
      %v559 = vand.u32 %v251, 4294901760
      %560 = vmatmul.f32.gmra.mxu0 %v559
      %v561 = vpop.f32.mrf.mxu0
      %v562 = vadd.f32 %v524, %v561
      %v563 = vand.u32 %v254, 4294901760
      %564 = vmatmul.f32.gmra.mxu0 %v563
      %v565 = vpop.f32.mrf.mxu0
      %v566 = vadd.f32 %v528, %v565
      %567 = vdwg.mxu0
      %568 = vmatpush.msra.mxu0 0.0
      %569 = vmatpush.msra.mxu0 0.0
      %570 = vmatpush.msra.mxu0 0.0
      %571 = vmatpush.msra.mxu0 0.0
      %572 = vmatpush.msra.mxu0 0.0
      %573 = vmatpush.msra.mxu0 0.0
      %574 = vmatpush.msra.mxu0 0.0
      %v575 = vand.u32 %v242, 4294901760
      %576 = vmatpush.msra.mxu0 %v575
      %v577 = vand.u32 %v237, 4294901760
      %578 = vmatpush.msra.mxu0 %v577
      %v579 = vand.u32 %v232, 4294901760
      %580 = vmatpush.msra.mxu0 %v579
      %v581 = vand.u32 %v227, 4294901760
      %582 = vmatpush.msra.mxu0 %v581
      %v583 = vand.u32 %v222, 4294901760
      %584 = vmatpush.msra.mxu0 %v583
      %v585 = vand.u32 %v217, 4294901760
      %586 = vmatpush.msra.mxu0 %v585
      %v587 = vand.u32 %v212, 4294901760
      %588 = vmatpush.msra.mxu0 %v587
      %v589 = vand.u32 %v207, 4294901760
      %590 = vmatpush.msra.mxu0 %v589
      %v591 = vand.u32 %v202, 4294901760
      %592 = vmatpush.msra.mxu0 %v591
      %v593 = vand.u32 %v248, 4294901760
      %v594 = vsub.f32 %v248, %v593
      %v595 = vand.u32 %v594, 4294901760
      %v596 = vsub.f32 %v594, %v595
      %v597 = vand.u32 %v596, 4294901760
      %598 = vmatmul.f32.gmra.mxu0 %v597
      %v599 = vpop.f32.mrf.mxu0
      %v600 = vadd.f32 0.0, %v599
      %v601 = vand.u32 %v251, 4294901760
      %v602 = vsub.f32 %v251, %v601
      %v603 = vand.u32 %v602, 4294901760
      %v604 = vsub.f32 %v602, %v603
      %v605 = vand.u32 %v604, 4294901760
      %606 = vmatmul.f32.gmra.mxu0 %v605
      %v607 = vpop.f32.mrf.mxu0
      %v608 = vadd.f32 0.0, %v607
      %v609 = vand.u32 %v254, 4294901760
      %v610 = vsub.f32 %v254, %v609
      %v611 = vand.u32 %v610, 4294901760
      %v612 = vsub.f32 %v610, %v611
      %v613 = vand.u32 %v612, 4294901760
      %614 = vmatmul.f32.gmra.mxu0 %v613
      %v615 = vpop.f32.mrf.mxu0
      %v616 = vadd.f32 0.0, %v615
      %617 = vdwg.mxu0
      %618 = vmatpush.msra.mxu0 0.0
      %619 = vmatpush.msra.mxu0 0.0
      %620 = vmatpush.msra.mxu0 0.0
      %621 = vmatpush.msra.mxu0 0.0
      %622 = vmatpush.msra.mxu0 0.0
      %623 = vmatpush.msra.mxu0 0.0
      %624 = vmatpush.msra.mxu0 0.0
      %v625 = vand.u32 %v242, 4294901760
      %v626 = vsub.f32 %v242, %v625
      %v627 = vand.u32 %v626, 4294901760
      %v628 = vsub.f32 %v626, %v627
      %v629 = vand.u32 %v628, 4294901760
      %630 = vmatpush.msra.mxu0 %v629
      %v631 = vand.u32 %v237, 4294901760
      %v632 = vsub.f32 %v237, %v631
      %v633 = vand.u32 %v632, 4294901760
      %v634 = vsub.f32 %v632, %v633
      %v635 = vand.u32 %v634, 4294901760
      %636 = vmatpush.msra.mxu0 %v635
      %v637 = vand.u32 %v232, 4294901760
      %v638 = vsub.f32 %v232, %v637
      %v639 = vand.u32 %v638, 4294901760
      %v640 = vsub.f32 %v638, %v639
      %v641 = vand.u32 %v640, 4294901760
      %642 = vmatpush.msra.mxu0 %v641
      %v643 = vand.u32 %v227, 4294901760
      %v644 = vsub.f32 %v227, %v643
      %v645 = vand.u32 %v644, 4294901760
      %v646 = vsub.f32 %v644, %v645
      %v647 = vand.u32 %v646, 4294901760
      %648 = vmatpush.msra.mxu0 %v647
      %v649 = vand.u32 %v222, 4294901760
      %v650 = vsub.f32 %v222, %v649
      %v651 = vand.u32 %v650, 4294901760
      %v652 = vsub.f32 %v650, %v651
      %v653 = vand.u32 %v652, 4294901760
      %654 = vmatpush.msra.mxu0 %v653
      %v655 = vand.u32 %v217, 4294901760
      %v656 = vsub.f32 %v217, %v655
      %v657 = vand.u32 %v656, 4294901760
      %v658 = vsub.f32 %v656, %v657
      %v659 = vand.u32 %v658, 4294901760
      %660 = vmatpush.msra.mxu0 %v659
      %v661 = vand.u32 %v212, 4294901760
      %v662 = vsub.f32 %v212, %v661
      %v663 = vand.u32 %v662, 4294901760
      %v664 = vsub.f32 %v662, %v663
      %v665 = vand.u32 %v664, 4294901760
      %666 = vmatpush.msra.mxu0 %v665
      %v667 = vand.u32 %v207, 4294901760
      %v668 = vsub.f32 %v207, %v667
      %v669 = vand.u32 %v668, 4294901760
      %v670 = vsub.f32 %v668, %v669
      %v671 = vand.u32 %v670, 4294901760
      %672 = vmatpush.msra.mxu0 %v671
      %v673 = vand.u32 %v202, 4294901760
      %v674 = vsub.f32 %v202, %v673
      %v675 = vand.u32 %v674, 4294901760
      %v676 = vsub.f32 %v674, %v675
      %v677 = vand.u32 %v676, 4294901760
      %678 = vmatpush.msra.mxu0 %v677
      %v679 = vand.u32 %v248, 4294901760
      %680 = vmatmul.f32.gmra.mxu0 %v679
      %v681 = vpop.f32.mrf.mxu0
      %v682 = vadd.f32 %v600, %v681
      %v683 = vand.u32 %v251, 4294901760
      %684 = vmatmul.f32.gmra.mxu0 %v683
      %v685 = vpop.f32.mrf.mxu0
      %v686 = vadd.f32 %v608, %v685
      %v687 = vand.u32 %v254, 4294901760
      %688 = vmatmul.f32.gmra.mxu0 %v687
      %v689 = vpop.f32.mrf.mxu0
      %v690 = vadd.f32 %v616, %v689
      %691 = vdwg.mxu0
      %692 = vmatpush.msra.mxu0 0.0
      %693 = vmatpush.msra.mxu0 0.0
      %694 = vmatpush.msra.mxu0 0.0
      %695 = vmatpush.msra.mxu0 0.0
      %696 = vmatpush.msra.mxu0 0.0
      %697 = vmatpush.msra.mxu0 0.0
      %698 = vmatpush.msra.mxu0 0.0
      %v699 = vand.u32 %v242, 4294901760
      %v700 = vsub.f32 %v242, %v699
      %701 = vmatpush.msra.mxu0 %v700
      %v702 = vand.u32 %v237, 4294901760
      %v703 = vsub.f32 %v237, %v702
      %704 = vmatpush.msra.mxu0 %v703
      %v705 = vand.u32 %v232, 4294901760
      %v706 = vsub.f32 %v232, %v705
      %707 = vmatpush.msra.mxu0 %v706
      %v708 = vand.u32 %v227, 4294901760
      %v709 = vsub.f32 %v227, %v708
      %710 = vmatpush.msra.mxu0 %v709
      %v711 = vand.u32 %v222, 4294901760
      %v712 = vsub.f32 %v222, %v711
      %713 = vmatpush.msra.mxu0 %v712
      %v714 = vand.u32 %v217, 4294901760
      %v715 = vsub.f32 %v217, %v714
      %716 = vmatpush.msra.mxu0 %v715
      %v717 = vand.u32 %v212, 4294901760
      %v718 = vsub.f32 %v212, %v717
      %719 = vmatpush.msra.mxu0 %v718
      %v720 = vand.u32 %v207, 4294901760
      %v721 = vsub.f32 %v207, %v720
      %722 = vmatpush.msra.mxu0 %v721
      %v723 = vand.u32 %v202, 4294901760
      %v724 = vsub.f32 %v202, %v723
      %725 = vmatpush.msra.mxu0 %v724
      %v726 = vand.u32 %v248, 4294901760
      %v727 = vsub.f32 %v248, %v726
      %728 = vmatmul.f32.gmra.mxu0 %v727
      %v729 = vpop.f32.mrf.mxu0
      %v730 = vadd.f32 %v682, %v729
      %v731 = vand.u32 %v251, 4294901760
      %v732 = vsub.f32 %v251, %v731
      %733 = vmatmul.f32.gmra.mxu0 %v732
      %v734 = vpop.f32.mrf.mxu0
      %v735 = vadd.f32 %v686, %v734
      %v736 = vand.u32 %v254, 4294901760
      %v737 = vsub.f32 %v254, %v736
      %738 = vmatmul.f32.gmra.mxu0 %v737
      %v739 = vpop.f32.mrf.mxu0
      %v740 = vadd.f32 %v690, %v739
      %741 = vdwg.mxu0
      %742 = vmatpush.msra.mxu0 0.0
      %743 = vmatpush.msra.mxu0 0.0
      %744 = vmatpush.msra.mxu0 0.0
      %745 = vmatpush.msra.mxu0 0.0
      %746 = vmatpush.msra.mxu0 0.0
      %747 = vmatpush.msra.mxu0 0.0
      %748 = vmatpush.msra.mxu0 0.0
      %v749 = vand.u32 %v242, 4294901760
      %750 = vmatpush.msra.mxu0 %v749
      %v751 = vand.u32 %v237, 4294901760
      %752 = vmatpush.msra.mxu0 %v751
      %v753 = vand.u32 %v232, 4294901760
      %754 = vmatpush.msra.mxu0 %v753
      %v755 = vand.u32 %v227, 4294901760
      %756 = vmatpush.msra.mxu0 %v755
      %v757 = vand.u32 %v222, 4294901760
      %758 = vmatpush.msra.mxu0 %v757
      %v759 = vand.u32 %v217, 4294901760
      %760 = vmatpush.msra.mxu0 %v759
      %v761 = vand.u32 %v212, 4294901760
      %762 = vmatpush.msra.mxu0 %v761
      %v763 = vand.u32 %v207, 4294901760
      %764 = vmatpush.msra.mxu0 %v763
      %v765 = vand.u32 %v202, 4294901760
      %766 = vmatpush.msra.mxu0 %v765
      %v767 = vand.u32 %v248, 4294901760
      %v768 = vsub.f32 %v248, %v767
      %v769 = vand.u32 %v768, 4294901760
      %770 = vmatmul.f32.gmra.mxu0 %v769
      %v771 = vpop.f32.mrf.mxu0
      %v772 = vadd.f32 %v730, %v771
      %v773 = vand.u32 %v251, 4294901760
      %v774 = vsub.f32 %v251, %v773
      %v775 = vand.u32 %v774, 4294901760
      %776 = vmatmul.f32.gmra.mxu0 %v775
      %v777 = vpop.f32.mrf.mxu0
      %v778 = vadd.f32 %v735, %v777
      %v779 = vand.u32 %v254, 4294901760
      %v780 = vsub.f32 %v254, %v779
      %v781 = vand.u32 %v780, 4294901760
      %782 = vmatmul.f32.gmra.mxu0 %v781
      %v783 = vpop.f32.mrf.mxu0
      %v784 = vadd.f32 %v740, %v783
      %785 = vdwg.mxu0
      %786 = vmatpush.msra.mxu0 0.0
      %787 = vmatpush.msra.mxu0 0.0
      %788 = vmatpush.msra.mxu0 0.0
      %789 = vmatpush.msra.mxu0 0.0
      %790 = vmatpush.msra.mxu0 0.0
      %791 = vmatpush.msra.mxu0 0.0
      %792 = vmatpush.msra.mxu0 0.0
      %v793 = vand.u32 %v242, 4294901760
      %v794 = vsub.f32 %v242, %v793
      %v795 = vand.u32 %v794, 4294901760
      %796 = vmatpush.msra.mxu0 %v795
      %v797 = vand.u32 %v237, 4294901760
      %v798 = vsub.f32 %v237, %v797
      %v799 = vand.u32 %v798, 4294901760
      %800 = vmatpush.msra.mxu0 %v799
      %v801 = vand.u32 %v232, 4294901760
      %v802 = vsub.f32 %v232, %v801
      %v803 = vand.u32 %v802, 4294901760
      %804 = vmatpush.msra.mxu0 %v803
      %v805 = vand.u32 %v227, 4294901760
      %v806 = vsub.f32 %v227, %v805
      %v807 = vand.u32 %v806, 4294901760
      %808 = vmatpush.msra.mxu0 %v807
      %v809 = vand.u32 %v222, 4294901760
      %v810 = vsub.f32 %v222, %v809
      %v811 = vand.u32 %v810, 4294901760
      %812 = vmatpush.msra.mxu0 %v811
      %v813 = vand.u32 %v217, 4294901760
      %v814 = vsub.f32 %v217, %v813
      %v815 = vand.u32 %v814, 4294901760
      %816 = vmatpush.msra.mxu0 %v815
      %v817 = vand.u32 %v212, 4294901760
      %v818 = vsub.f32 %v212, %v817
      %v819 = vand.u32 %v818, 4294901760
      %820 = vmatpush.msra.mxu0 %v819
      %v821 = vand.u32 %v207, 4294901760
      %v822 = vsub.f32 %v207, %v821
      %v823 = vand.u32 %v822, 4294901760
      %824 = vmatpush.msra.mxu0 %v823
      %v825 = vand.u32 %v202, 4294901760
      %v826 = vsub.f32 %v202, %v825
      %v827 = vand.u32 %v826, 4294901760
      %828 = vmatpush.msra.mxu0 %v827
      %v829 = vand.u32 %v248, 4294901760
      %830 = vmatmul.f32.gmra.mxu0 %v829
      %v831 = vpop.f32.mrf.mxu0
      %v832 = vadd.f32 %v772, %v831
      %v833 = vand.u32 %v251, 4294901760
      %834 = vmatmul.f32.gmra.mxu0 %v833
      %v835 = vpop.f32.mrf.mxu0
      %v836 = vadd.f32 %v778, %v835
      %v837 = vand.u32 %v254, 4294901760
      %838 = vmatmul.f32.gmra.mxu0 %v837
      %v839 = vpop.f32.mrf.mxu0
      %v840 = vadd.f32 %v784, %v839
      %841 = vdwg.mxu0
      %842 = vmatpush.msra.mxu0 0.0
      %843 = vmatpush.msra.mxu0 0.0
      %844 = vmatpush.msra.mxu0 0.0
      %845 = vmatpush.msra.mxu0 0.0
      %846 = vmatpush.msra.mxu0 0.0
      %847 = vmatpush.msra.mxu0 0.0
      %848 = vmatpush.msra.mxu0 0.0
      %v849 = vand.u32 %v242, 4294901760
      %850 = vmatpush.msra.mxu0 %v849
      %v851 = vand.u32 %v237, 4294901760
      %852 = vmatpush.msra.mxu0 %v851
      %v853 = vand.u32 %v232, 4294901760
      %854 = vmatpush.msra.mxu0 %v853
      %v855 = vand.u32 %v227, 4294901760
      %856 = vmatpush.msra.mxu0 %v855
      %v857 = vand.u32 %v222, 4294901760
      %858 = vmatpush.msra.mxu0 %v857
      %v859 = vand.u32 %v217, 4294901760
      %860 = vmatpush.msra.mxu0 %v859
      %v861 = vand.u32 %v212, 4294901760
      %862 = vmatpush.msra.mxu0 %v861
      %v863 = vand.u32 %v207, 4294901760
      %864 = vmatpush.msra.mxu0 %v863
      %v865 = vand.u32 %v202, 4294901760
      %866 = vmatpush.msra.mxu0 %v865
      %v867 = vand.u32 %v248, 4294901760
      %868 = vmatmul.f32.gmra.mxu0 %v867
      %v869 = vpop.f32.mrf.mxu0
      %v870 = vadd.f32 %v832, %v869
      %v871 = vand.u32 %v251, 4294901760
      %872 = vmatmul.f32.gmra.mxu0 %v871
      %v873 = vpop.f32.mrf.mxu0
      %v874 = vadd.f32 %v836, %v873
      %v875 = vand.u32 %v254, 4294901760
      %876 = vmatmul.f32.gmra.mxu0 %v875
      %v877 = vpop.f32.mrf.mxu0
      %v878 = vadd.f32 %v840, %v877
      %879 = vdwg.mxu0
      %880 = vmatpush.msra.mxu0 0.0
      %881 = vmatpush.msra.mxu0 0.0
      %882 = vmatpush.msra.mxu0 0.0
      %883 = vmatpush.msra.mxu0 0.0
      %884 = vmatpush.msra.mxu0 0.0
      %885 = vmatpush.msra.mxu0 0.0
      %886 = vmatpush.msra.mxu0 0.0
      %v887 = vand.u32 %v243, 4294901760
      %888 = vmatpush.msra.mxu0 %v887
      %v889 = vand.u32 %v238, 4294901760
      %890 = vmatpush.msra.mxu0 %v889
      %v891 = vand.u32 %v233, 4294901760
      %892 = vmatpush.msra.mxu0 %v891
      %v893 = vand.u32 %v228, 4294901760
      %894 = vmatpush.msra.mxu0 %v893
      %v895 = vand.u32 %v223, 4294901760
      %896 = vmatpush.msra.mxu0 %v895
      %v897 = vand.u32 %v218, 4294901760
      %898 = vmatpush.msra.mxu0 %v897
      %v899 = vand.u32 %v213, 4294901760
      %900 = vmatpush.msra.mxu0 %v899
      %v901 = vand.u32 %v208, 4294901760
      %902 = vmatpush.msra.mxu0 %v901
      %v903 = vand.u32 %v203, 4294901760
      %904 = vmatpush.msra.mxu0 %v903
      %v905 = vand.u32 %v248, 4294901760
      %v906 = vsub.f32 %v248, %v905
      %v907 = vand.u32 %v906, 4294901760
      %v908 = vsub.f32 %v906, %v907
      %v909 = vand.u32 %v908, 4294901760
      %910 = vmatmul.f32.gmra.mxu0 %v909
      %v911 = vpop.f32.mrf.mxu0
      %v912 = vadd.f32 0.0, %v911
      %v913 = vand.u32 %v251, 4294901760
      %v914 = vsub.f32 %v251, %v913
      %v915 = vand.u32 %v914, 4294901760
      %v916 = vsub.f32 %v914, %v915
      %v917 = vand.u32 %v916, 4294901760
      %918 = vmatmul.f32.gmra.mxu0 %v917
      %v919 = vpop.f32.mrf.mxu0
      %v920 = vadd.f32 0.0, %v919
      %v921 = vand.u32 %v254, 4294901760
      %v922 = vsub.f32 %v254, %v921
      %v923 = vand.u32 %v922, 4294901760
      %v924 = vsub.f32 %v922, %v923
      %v925 = vand.u32 %v924, 4294901760
      %926 = vmatmul.f32.gmra.mxu0 %v925
      %v927 = vpop.f32.mrf.mxu0
      %v928 = vadd.f32 0.0, %v927
      %929 = vdwg.mxu0
      %930 = vmatpush.msra.mxu0 0.0
      %931 = vmatpush.msra.mxu0 0.0
      %932 = vmatpush.msra.mxu0 0.0
      %933 = vmatpush.msra.mxu0 0.0
      %934 = vmatpush.msra.mxu0 0.0
      %935 = vmatpush.msra.mxu0 0.0
      %936 = vmatpush.msra.mxu0 0.0
      %v937 = vand.u32 %v243, 4294901760
      %v938 = vsub.f32 %v243, %v937
      %v939 = vand.u32 %v938, 4294901760
      %v940 = vsub.f32 %v938, %v939
      %v941 = vand.u32 %v940, 4294901760
      %942 = vmatpush.msra.mxu0 %v941
      %v943 = vand.u32 %v238, 4294901760
      %v944 = vsub.f32 %v238, %v943
      %v945 = vand.u32 %v944, 4294901760
      %v946 = vsub.f32 %v944, %v945
      %v947 = vand.u32 %v946, 4294901760
      %948 = vmatpush.msra.mxu0 %v947
      %v949 = vand.u32 %v233, 4294901760
      %v950 = vsub.f32 %v233, %v949
      %v951 = vand.u32 %v950, 4294901760
      %v952 = vsub.f32 %v950, %v951
      %v953 = vand.u32 %v952, 4294901760
      %954 = vmatpush.msra.mxu0 %v953
      %v955 = vand.u32 %v228, 4294901760
      %v956 = vsub.f32 %v228, %v955
      %v957 = vand.u32 %v956, 4294901760
      %v958 = vsub.f32 %v956, %v957
      %v959 = vand.u32 %v958, 4294901760
      %960 = vmatpush.msra.mxu0 %v959
      %v961 = vand.u32 %v223, 4294901760
      %v962 = vsub.f32 %v223, %v961
      %v963 = vand.u32 %v962, 4294901760
      %v964 = vsub.f32 %v962, %v963
      %v965 = vand.u32 %v964, 4294901760
      %966 = vmatpush.msra.mxu0 %v965
      %v967 = vand.u32 %v218, 4294901760
      %v968 = vsub.f32 %v218, %v967
      %v969 = vand.u32 %v968, 4294901760
      %v970 = vsub.f32 %v968, %v969
      %v971 = vand.u32 %v970, 4294901760
      %972 = vmatpush.msra.mxu0 %v971
      %v973 = vand.u32 %v213, 4294901760
      %v974 = vsub.f32 %v213, %v973
      %v975 = vand.u32 %v974, 4294901760
      %v976 = vsub.f32 %v974, %v975
      %v977 = vand.u32 %v976, 4294901760
      %978 = vmatpush.msra.mxu0 %v977
      %v979 = vand.u32 %v208, 4294901760
      %v980 = vsub.f32 %v208, %v979
      %v981 = vand.u32 %v980, 4294901760
      %v982 = vsub.f32 %v980, %v981
      %v983 = vand.u32 %v982, 4294901760
      %984 = vmatpush.msra.mxu0 %v983
      %v985 = vand.u32 %v203, 4294901760
      %v986 = vsub.f32 %v203, %v985
      %v987 = vand.u32 %v986, 4294901760
      %v988 = vsub.f32 %v986, %v987
      %v989 = vand.u32 %v988, 4294901760
      %990 = vmatpush.msra.mxu0 %v989
      %v991 = vand.u32 %v248, 4294901760
      %992 = vmatmul.f32.gmra.mxu0 %v991
      %v993 = vpop.f32.mrf.mxu0
      %v994 = vadd.f32 %v912, %v993
      %v995 = vand.u32 %v251, 4294901760
      %996 = vmatmul.f32.gmra.mxu0 %v995
      %v997 = vpop.f32.mrf.mxu0
      %v998 = vadd.f32 %v920, %v997
      %v999 = vand.u32 %v254, 4294901760
      %1000 = vmatmul.f32.gmra.mxu0 %v999
      %v1001 = vpop.f32.mrf.mxu0
      %v1002 = vadd.f32 %v928, %v1001
      %1003 = vdwg.mxu0
      %1004 = vmatpush.msra.mxu0 0.0
      %1005 = vmatpush.msra.mxu0 0.0
      %1006 = vmatpush.msra.mxu0 0.0
      %1007 = vmatpush.msra.mxu0 0.0
      %1008 = vmatpush.msra.mxu0 0.0
      %1009 = vmatpush.msra.mxu0 0.0
      %1010 = vmatpush.msra.mxu0 0.0
      %v1011 = vand.u32 %v243, 4294901760
      %v1012 = vsub.f32 %v243, %v1011
      %1013 = vmatpush.msra.mxu0 %v1012
      %v1014 = vand.u32 %v238, 4294901760
      %v1015 = vsub.f32 %v238, %v1014
      %1016 = vmatpush.msra.mxu0 %v1015
      %v1017 = vand.u32 %v233, 4294901760
      %v1018 = vsub.f32 %v233, %v1017
      %1019 = vmatpush.msra.mxu0 %v1018
      %v1020 = vand.u32 %v228, 4294901760
      %v1021 = vsub.f32 %v228, %v1020
      %1022 = vmatpush.msra.mxu0 %v1021
      %v1023 = vand.u32 %v223, 4294901760
      %v1024 = vsub.f32 %v223, %v1023
      %1025 = vmatpush.msra.mxu0 %v1024
      %v1026 = vand.u32 %v218, 4294901760
      %v1027 = vsub.f32 %v218, %v1026
      %1028 = vmatpush.msra.mxu0 %v1027
      %v1029 = vand.u32 %v213, 4294901760
      %v1030 = vsub.f32 %v213, %v1029
      %1031 = vmatpush.msra.mxu0 %v1030
      %v1032 = vand.u32 %v208, 4294901760
      %v1033 = vsub.f32 %v208, %v1032
      %1034 = vmatpush.msra.mxu0 %v1033
      %v1035 = vand.u32 %v203, 4294901760
      %v1036 = vsub.f32 %v203, %v1035
      %1037 = vmatpush.msra.mxu0 %v1036
      %v1038 = vand.u32 %v248, 4294901760
      %v1039 = vsub.f32 %v248, %v1038
      %1040 = vmatmul.f32.gmra.mxu0 %v1039
      %v1041 = vpop.f32.mrf.mxu0
      %v1042 = vadd.f32 %v994, %v1041
      %v1043 = vand.u32 %v251, 4294901760
      %v1044 = vsub.f32 %v251, %v1043
      %1045 = vmatmul.f32.gmra.mxu0 %v1044
      %v1046 = vpop.f32.mrf.mxu0
      %v1047 = vadd.f32 %v998, %v1046
      %v1048 = vand.u32 %v254, 4294901760
      %v1049 = vsub.f32 %v254, %v1048
      %1050 = vmatmul.f32.gmra.mxu0 %v1049
      %v1051 = vpop.f32.mrf.mxu0
      %v1052 = vadd.f32 %v1002, %v1051
      %1053 = vdwg.mxu0
      %1054 = vmatpush.msra.mxu0 0.0
      %1055 = vmatpush.msra.mxu0 0.0
      %1056 = vmatpush.msra.mxu0 0.0
      %1057 = vmatpush.msra.mxu0 0.0
      %1058 = vmatpush.msra.mxu0 0.0
      %1059 = vmatpush.msra.mxu0 0.0
      %1060 = vmatpush.msra.mxu0 0.0
      %v1061 = vand.u32 %v243, 4294901760
      %1062 = vmatpush.msra.mxu0 %v1061
      %v1063 = vand.u32 %v238, 4294901760
      %1064 = vmatpush.msra.mxu0 %v1063
      %v1065 = vand.u32 %v233, 4294901760
      %1066 = vmatpush.msra.mxu0 %v1065
      %v1067 = vand.u32 %v228, 4294901760
      %1068 = vmatpush.msra.mxu0 %v1067
      %v1069 = vand.u32 %v223, 4294901760
      %1070 = vmatpush.msra.mxu0 %v1069
      %v1071 = vand.u32 %v218, 4294901760
      %1072 = vmatpush.msra.mxu0 %v1071
      %v1073 = vand.u32 %v213, 4294901760
      %1074 = vmatpush.msra.mxu0 %v1073
      %v1075 = vand.u32 %v208, 4294901760
      %1076 = vmatpush.msra.mxu0 %v1075
      %v1077 = vand.u32 %v203, 4294901760
      %1078 = vmatpush.msra.mxu0 %v1077
      %v1079 = vand.u32 %v248, 4294901760
      %v1080 = vsub.f32 %v248, %v1079
      %v1081 = vand.u32 %v1080, 4294901760
      %1082 = vmatmul.f32.gmra.mxu0 %v1081
      %v1083 = vpop.f32.mrf.mxu0
      %v1084 = vadd.f32 %v1042, %v1083
      %v1085 = vand.u32 %v251, 4294901760
      %v1086 = vsub.f32 %v251, %v1085
      %v1087 = vand.u32 %v1086, 4294901760
      %1088 = vmatmul.f32.gmra.mxu0 %v1087
      %v1089 = vpop.f32.mrf.mxu0
      %v1090 = vadd.f32 %v1047, %v1089
      %v1091 = vand.u32 %v254, 4294901760
      %v1092 = vsub.f32 %v254, %v1091
      %v1093 = vand.u32 %v1092, 4294901760
      %1094 = vmatmul.f32.gmra.mxu0 %v1093
      %v1095 = vpop.f32.mrf.mxu0
      %v1096 = vadd.f32 %v1052, %v1095
      %1097 = vdwg.mxu0
      %1098 = vmatpush.msra.mxu0 0.0
      %1099 = vmatpush.msra.mxu0 0.0
      %1100 = vmatpush.msra.mxu0 0.0
      %1101 = vmatpush.msra.mxu0 0.0
      %1102 = vmatpush.msra.mxu0 0.0
      %1103 = vmatpush.msra.mxu0 0.0
      %1104 = vmatpush.msra.mxu0 0.0
      %v1105 = vand.u32 %v243, 4294901760
      %v1106 = vsub.f32 %v243, %v1105
      %v1107 = vand.u32 %v1106, 4294901760
      %1108 = vmatpush.msra.mxu0 %v1107
      %v1109 = vand.u32 %v238, 4294901760
      %v1110 = vsub.f32 %v238, %v1109
      %v1111 = vand.u32 %v1110, 4294901760
      %1112 = vmatpush.msra.mxu0 %v1111
      %v1113 = vand.u32 %v233, 4294901760
      %v1114 = vsub.f32 %v233, %v1113
      %v1115 = vand.u32 %v1114, 4294901760
      %1116 = vmatpush.msra.mxu0 %v1115
      %v1117 = vand.u32 %v228, 4294901760
      %v1118 = vsub.f32 %v228, %v1117
      %v1119 = vand.u32 %v1118, 4294901760
      %1120 = vmatpush.msra.mxu0 %v1119
      %v1121 = vand.u32 %v223, 4294901760
      %v1122 = vsub.f32 %v223, %v1121
      %v1123 = vand.u32 %v1122, 4294901760
      %1124 = vmatpush.msra.mxu0 %v1123
      %v1125 = vand.u32 %v218, 4294901760
      %v1126 = vsub.f32 %v218, %v1125
      %v1127 = vand.u32 %v1126, 4294901760
      %1128 = vmatpush.msra.mxu0 %v1127
      %v1129 = vand.u32 %v213, 4294901760
      %v1130 = vsub.f32 %v213, %v1129
      %v1131 = vand.u32 %v1130, 4294901760
      %1132 = vmatpush.msra.mxu0 %v1131
      %v1133 = vand.u32 %v208, 4294901760
      %v1134 = vsub.f32 %v208, %v1133
      %v1135 = vand.u32 %v1134, 4294901760
      %1136 = vmatpush.msra.mxu0 %v1135
      %v1137 = vand.u32 %v203, 4294901760
      %v1138 = vsub.f32 %v203, %v1137
      %v1139 = vand.u32 %v1138, 4294901760
      %1140 = vmatpush.msra.mxu0 %v1139
      %v1141 = vand.u32 %v248, 4294901760
      %1142 = vmatmul.f32.gmra.mxu0 %v1141
      %v1143 = vpop.f32.mrf.mxu0
      %v1144 = vadd.f32 %v1084, %v1143
      %v1145 = vand.u32 %v251, 4294901760
      %1146 = vmatmul.f32.gmra.mxu0 %v1145
      %v1147 = vpop.f32.mrf.mxu0
      %v1148 = vadd.f32 %v1090, %v1147
      %v1149 = vand.u32 %v254, 4294901760
      %1150 = vmatmul.f32.gmra.mxu0 %v1149
      %v1151 = vpop.f32.mrf.mxu0
      %v1152 = vadd.f32 %v1096, %v1151
      %1153 = vdwg.mxu0
      %1154 = vmatpush.msra.mxu0 0.0
      %1155 = vmatpush.msra.mxu0 0.0
      %1156 = vmatpush.msra.mxu0 0.0
      %1157 = vmatpush.msra.mxu0 0.0
      %1158 = vmatpush.msra.mxu0 0.0
      %1159 = vmatpush.msra.mxu0 0.0
      %1160 = vmatpush.msra.mxu0 0.0
      %v1161 = vand.u32 %v243, 4294901760
      %1162 = vmatpush.msra.mxu0 %v1161
      %v1163 = vand.u32 %v238, 4294901760
      %1164 = vmatpush.msra.mxu0 %v1163
      %v1165 = vand.u32 %v233, 4294901760
      %1166 = vmatpush.msra.mxu0 %v1165
      %v1167 = vand.u32 %v228, 4294901760
      %1168 = vmatpush.msra.mxu0 %v1167
      %v1169 = vand.u32 %v223, 4294901760
      %1170 = vmatpush.msra.mxu0 %v1169
      %v1171 = vand.u32 %v218, 4294901760
      %1172 = vmatpush.msra.mxu0 %v1171
      %v1173 = vand.u32 %v213, 4294901760
      %1174 = vmatpush.msra.mxu0 %v1173
      %v1175 = vand.u32 %v208, 4294901760
      %1176 = vmatpush.msra.mxu0 %v1175
      %v1177 = vand.u32 %v203, 4294901760
      %1178 = vmatpush.msra.mxu0 %v1177
      %v1179 = vand.u32 %v248, 4294901760
      %1180 = vmatmul.f32.gmra.mxu0 %v1179
      %v1181 = vpop.f32.mrf.mxu0
      %v1182 = vadd.f32 %v1144, %v1181
      %v1183 = vand.u32 %v251, 4294901760
      %1184 = vmatmul.f32.gmra.mxu0 %v1183
      %v1185 = vpop.f32.mrf.mxu0
      %v1186 = vadd.f32 %v1148, %v1185
      %v1187 = vand.u32 %v254, 4294901760
      %1188 = vmatmul.f32.gmra.mxu0 %v1187
      %v1189 = vpop.f32.mrf.mxu0
      %v1190 = vadd.f32 %v1152, %v1189
      %1191 = vdwg.mxu0
      %1192 = vmatpush.msra.mxu0 0.0
      %1193 = vmatpush.msra.mxu0 0.0
      %1194 = vmatpush.msra.mxu0 0.0
      %1195 = vmatpush.msra.mxu0 0.0
      %1196 = vmatpush.msra.mxu0 0.0
      %1197 = vmatpush.msra.mxu0 0.0
      %1198 = vmatpush.msra.mxu0 0.0
      %v1199 = vand.u32 %v244, 4294901760
      %1200 = vmatpush.msra.mxu0 %v1199
      %v1201 = vand.u32 %v239, 4294901760
      %1202 = vmatpush.msra.mxu0 %v1201
      %v1203 = vand.u32 %v234, 4294901760
      %1204 = vmatpush.msra.mxu0 %v1203
      %v1205 = vand.u32 %v229, 4294901760
      %1206 = vmatpush.msra.mxu0 %v1205
      %v1207 = vand.u32 %v224, 4294901760
      %1208 = vmatpush.msra.mxu0 %v1207
      %v1209 = vand.u32 %v219, 4294901760
      %1210 = vmatpush.msra.mxu0 %v1209
      %v1211 = vand.u32 %v214, 4294901760
      %1212 = vmatpush.msra.mxu0 %v1211
      %v1213 = vand.u32 %v209, 4294901760
      %1214 = vmatpush.msra.mxu0 %v1213
      %v1215 = vand.u32 %v204, 4294901760
      %1216 = vmatpush.msra.mxu0 %v1215
      %v1217 = vand.u32 %v248, 4294901760
      %v1218 = vsub.f32 %v248, %v1217
      %v1219 = vand.u32 %v1218, 4294901760
      %v1220 = vsub.f32 %v1218, %v1219
      %v1221 = vand.u32 %v1220, 4294901760
      %1222 = vmatmul.f32.gmra.mxu0 %v1221
      %v1223 = vpop.f32.mrf.mxu0
      %v1224 = vadd.f32 0.0, %v1223
      %v1225 = vand.u32 %v251, 4294901760
      %v1226 = vsub.f32 %v251, %v1225
      %v1227 = vand.u32 %v1226, 4294901760
      %v1228 = vsub.f32 %v1226, %v1227
      %v1229 = vand.u32 %v1228, 4294901760
      %1230 = vmatmul.f32.gmra.mxu0 %v1229
      %v1231 = vpop.f32.mrf.mxu0
      %v1232 = vadd.f32 0.0, %v1231
      %v1233 = vand.u32 %v254, 4294901760
      %v1234 = vsub.f32 %v254, %v1233
      %v1235 = vand.u32 %v1234, 4294901760
      %v1236 = vsub.f32 %v1234, %v1235
      %v1237 = vand.u32 %v1236, 4294901760
      %1238 = vmatmul.f32.gmra.mxu0 %v1237
      %v1239 = vpop.f32.mrf.mxu0
      %v1240 = vadd.f32 0.0, %v1239
      %1241 = vdwg.mxu0
      %1242 = vmatpush.msra.mxu0 0.0
      %1243 = vmatpush.msra.mxu0 0.0
      %1244 = vmatpush.msra.mxu0 0.0
      %1245 = vmatpush.msra.mxu0 0.0
      %1246 = vmatpush.msra.mxu0 0.0
      %1247 = vmatpush.msra.mxu0 0.0
      %1248 = vmatpush.msra.mxu0 0.0
      %v1249 = vand.u32 %v244, 4294901760
      %v1250 = vsub.f32 %v244, %v1249
      %v1251 = vand.u32 %v1250, 4294901760
      %v1252 = vsub.f32 %v1250, %v1251
      %v1253 = vand.u32 %v1252, 4294901760
      %1254 = vmatpush.msra.mxu0 %v1253
      %v1255 = vand.u32 %v239, 4294901760
      %v1256 = vsub.f32 %v239, %v1255
      %v1257 = vand.u32 %v1256, 4294901760
      %v1258 = vsub.f32 %v1256, %v1257
      %v1259 = vand.u32 %v1258, 4294901760
      %1260 = vmatpush.msra.mxu0 %v1259
      %v1261 = vand.u32 %v234, 4294901760
      %v1262 = vsub.f32 %v234, %v1261
      %v1263 = vand.u32 %v1262, 4294901760
      %v1264 = vsub.f32 %v1262, %v1263
      %v1265 = vand.u32 %v1264, 4294901760
      %1266 = vmatpush.msra.mxu0 %v1265
      %v1267 = vand.u32 %v229, 4294901760
      %v1268 = vsub.f32 %v229, %v1267
      %v1269 = vand.u32 %v1268, 4294901760
      %v1270 = vsub.f32 %v1268, %v1269
      %v1271 = vand.u32 %v1270, 4294901760
      %1272 = vmatpush.msra.mxu0 %v1271
      %v1273 = vand.u32 %v224, 4294901760
      %v1274 = vsub.f32 %v224, %v1273
      %v1275 = vand.u32 %v1274, 4294901760
      %v1276 = vsub.f32 %v1274, %v1275
      %v1277 = vand.u32 %v1276, 4294901760
      %1278 = vmatpush.msra.mxu0 %v1277
      %v1279 = vand.u32 %v219, 4294901760
      %v1280 = vsub.f32 %v219, %v1279
      %v1281 = vand.u32 %v1280, 4294901760
      %v1282 = vsub.f32 %v1280, %v1281
      %v1283 = vand.u32 %v1282, 4294901760
      %1284 = vmatpush.msra.mxu0 %v1283
      %v1285 = vand.u32 %v214, 4294901760
      %v1286 = vsub.f32 %v214, %v1285
      %v1287 = vand.u32 %v1286, 4294901760
      %v1288 = vsub.f32 %v1286, %v1287
      %v1289 = vand.u32 %v1288, 4294901760
      %1290 = vmatpush.msra.mxu0 %v1289
      %v1291 = vand.u32 %v209, 4294901760
      %v1292 = vsub.f32 %v209, %v1291
      %v1293 = vand.u32 %v1292, 4294901760
      %v1294 = vsub.f32 %v1292, %v1293
      %v1295 = vand.u32 %v1294, 4294901760
      %1296 = vmatpush.msra.mxu0 %v1295
      %v1297 = vand.u32 %v204, 4294901760
      %v1298 = vsub.f32 %v204, %v1297
      %v1299 = vand.u32 %v1298, 4294901760
      %v1300 = vsub.f32 %v1298, %v1299
      %v1301 = vand.u32 %v1300, 4294901760
      %1302 = vmatpush.msra.mxu0 %v1301
      %v1303 = vand.u32 %v248, 4294901760
      %1304 = vmatmul.f32.gmra.mxu0 %v1303
      %v1305 = vpop.f32.mrf.mxu0
      %v1306 = vadd.f32 %v1224, %v1305
      %v1307 = vand.u32 %v251, 4294901760
      %1308 = vmatmul.f32.gmra.mxu0 %v1307
      %v1309 = vpop.f32.mrf.mxu0
      %v1310 = vadd.f32 %v1232, %v1309
      %v1311 = vand.u32 %v254, 4294901760
      %1312 = vmatmul.f32.gmra.mxu0 %v1311
      %v1313 = vpop.f32.mrf.mxu0
      %v1314 = vadd.f32 %v1240, %v1313
      %1315 = vdwg.mxu0
      %1316 = vmatpush.msra.mxu0 0.0
      %1317 = vmatpush.msra.mxu0 0.0
      %1318 = vmatpush.msra.mxu0 0.0
      %1319 = vmatpush.msra.mxu0 0.0
      %1320 = vmatpush.msra.mxu0 0.0
      %1321 = vmatpush.msra.mxu0 0.0
      %1322 = vmatpush.msra.mxu0 0.0
      %v1323 = vand.u32 %v244, 4294901760
      %v1324 = vsub.f32 %v244, %v1323
      %1325 = vmatpush.msra.mxu0 %v1324
      %v1326 = vand.u32 %v239, 4294901760
      %v1327 = vsub.f32 %v239, %v1326
      %1328 = vmatpush.msra.mxu0 %v1327
      %v1329 = vand.u32 %v234, 4294901760
      %v1330 = vsub.f32 %v234, %v1329
      %1331 = vmatpush.msra.mxu0 %v1330
      %v1332 = vand.u32 %v229, 4294901760
      %v1333 = vsub.f32 %v229, %v1332
      %1334 = vmatpush.msra.mxu0 %v1333
      %v1335 = vand.u32 %v224, 4294901760
      %v1336 = vsub.f32 %v224, %v1335
      %1337 = vmatpush.msra.mxu0 %v1336
      %v1338 = vand.u32 %v219, 4294901760
      %v1339 = vsub.f32 %v219, %v1338
      %1340 = vmatpush.msra.mxu0 %v1339
      %v1341 = vand.u32 %v214, 4294901760
      %v1342 = vsub.f32 %v214, %v1341
      %1343 = vmatpush.msra.mxu0 %v1342
      %v1344 = vand.u32 %v209, 4294901760
      %v1345 = vsub.f32 %v209, %v1344
      %1346 = vmatpush.msra.mxu0 %v1345
      %v1347 = vand.u32 %v204, 4294901760
      %v1348 = vsub.f32 %v204, %v1347
      %1349 = vmatpush.msra.mxu0 %v1348
      %v1350 = vand.u32 %v248, 4294901760
      %v1351 = vsub.f32 %v248, %v1350
      %1352 = vmatmul.f32.gmra.mxu0 %v1351
      %v1353 = vpop.f32.mrf.mxu0
      %v1354 = vadd.f32 %v1306, %v1353
      %v1355 = vand.u32 %v251, 4294901760
      %v1356 = vsub.f32 %v251, %v1355
      %1357 = vmatmul.f32.gmra.mxu0 %v1356
      %v1358 = vpop.f32.mrf.mxu0
      %v1359 = vadd.f32 %v1310, %v1358
      %v1360 = vand.u32 %v254, 4294901760
      %v1361 = vsub.f32 %v254, %v1360
      %1362 = vmatmul.f32.gmra.mxu0 %v1361
      %v1363 = vpop.f32.mrf.mxu0
      %v1364 = vadd.f32 %v1314, %v1363
      %1365 = vdwg.mxu0
      %1366 = vmatpush.msra.mxu0 0.0
      %1367 = vmatpush.msra.mxu0 0.0
      %1368 = vmatpush.msra.mxu0 0.0
      %1369 = vmatpush.msra.mxu0 0.0
      %1370 = vmatpush.msra.mxu0 0.0
      %1371 = vmatpush.msra.mxu0 0.0
      %1372 = vmatpush.msra.mxu0 0.0
      %v1373 = vand.u32 %v244, 4294901760
      %1374 = vmatpush.msra.mxu0 %v1373
      %v1375 = vand.u32 %v239, 4294901760
      %1376 = vmatpush.msra.mxu0 %v1375
      %v1377 = vand.u32 %v234, 4294901760
      %1378 = vmatpush.msra.mxu0 %v1377
      %v1379 = vand.u32 %v229, 4294901760
      %1380 = vmatpush.msra.mxu0 %v1379
      %v1381 = vand.u32 %v224, 4294901760
      %1382 = vmatpush.msra.mxu0 %v1381
      %v1383 = vand.u32 %v219, 4294901760
      %1384 = vmatpush.msra.mxu0 %v1383
      %v1385 = vand.u32 %v214, 4294901760
      %1386 = vmatpush.msra.mxu0 %v1385
      %v1387 = vand.u32 %v209, 4294901760
      %1388 = vmatpush.msra.mxu0 %v1387
      %v1389 = vand.u32 %v204, 4294901760
      %1390 = vmatpush.msra.mxu0 %v1389
      %v1391 = vand.u32 %v248, 4294901760
      %v1392 = vsub.f32 %v248, %v1391
      %v1393 = vand.u32 %v1392, 4294901760
      %1394 = vmatmul.f32.gmra.mxu0 %v1393
      %v1395 = vpop.f32.mrf.mxu0
      %v1396 = vadd.f32 %v1354, %v1395
      %v1397 = vand.u32 %v251, 4294901760
      %v1398 = vsub.f32 %v251, %v1397
      %v1399 = vand.u32 %v1398, 4294901760
      %1400 = vmatmul.f32.gmra.mxu0 %v1399
      %v1401 = vpop.f32.mrf.mxu0
      %v1402 = vadd.f32 %v1359, %v1401
      %v1403 = vand.u32 %v254, 4294901760
      %v1404 = vsub.f32 %v254, %v1403
      %v1405 = vand.u32 %v1404, 4294901760
      %1406 = vmatmul.f32.gmra.mxu0 %v1405
      %v1407 = vpop.f32.mrf.mxu0
      %v1408 = vadd.f32 %v1364, %v1407
      %1409 = vdwg.mxu0
      %1410 = vmatpush.msra.mxu0 0.0
      %1411 = vmatpush.msra.mxu0 0.0
      %1412 = vmatpush.msra.mxu0 0.0
      %1413 = vmatpush.msra.mxu0 0.0
      %1414 = vmatpush.msra.mxu0 0.0
      %1415 = vmatpush.msra.mxu0 0.0
      %1416 = vmatpush.msra.mxu0 0.0
      %v1417 = vand.u32 %v244, 4294901760
      %v1418 = vsub.f32 %v244, %v1417
      %v1419 = vand.u32 %v1418, 4294901760
      %1420 = vmatpush.msra.mxu0 %v1419
      %v1421 = vand.u32 %v239, 4294901760
      %v1422 = vsub.f32 %v239, %v1421
      %v1423 = vand.u32 %v1422, 4294901760
      %1424 = vmatpush.msra.mxu0 %v1423
      %v1425 = vand.u32 %v234, 4294901760
      %v1426 = vsub.f32 %v234, %v1425
      %v1427 = vand.u32 %v1426, 4294901760
      %1428 = vmatpush.msra.mxu0 %v1427
      %v1429 = vand.u32 %v229, 4294901760
      %v1430 = vsub.f32 %v229, %v1429
      %v1431 = vand.u32 %v1430, 4294901760
      %1432 = vmatpush.msra.mxu0 %v1431
      %v1433 = vand.u32 %v224, 4294901760
      %v1434 = vsub.f32 %v224, %v1433
      %v1435 = vand.u32 %v1434, 4294901760
      %1436 = vmatpush.msra.mxu0 %v1435
      %v1437 = vand.u32 %v219, 4294901760
      %v1438 = vsub.f32 %v219, %v1437
      %v1439 = vand.u32 %v1438, 4294901760
      %1440 = vmatpush.msra.mxu0 %v1439
      %v1441 = vand.u32 %v214, 4294901760
      %v1442 = vsub.f32 %v214, %v1441
      %v1443 = vand.u32 %v1442, 4294901760
      %1444 = vmatpush.msra.mxu0 %v1443
      %v1445 = vand.u32 %v209, 4294901760
      %v1446 = vsub.f32 %v209, %v1445
      %v1447 = vand.u32 %v1446, 4294901760
      %1448 = vmatpush.msra.mxu0 %v1447
      %v1449 = vand.u32 %v204, 4294901760
      %v1450 = vsub.f32 %v204, %v1449
      %v1451 = vand.u32 %v1450, 4294901760
      %1452 = vmatpush.msra.mxu0 %v1451
      %v1453 = vand.u32 %v248, 4294901760
      %1454 = vmatmul.f32.gmra.mxu0 %v1453
      %v1455 = vpop.f32.mrf.mxu0
      %v1456 = vadd.f32 %v1396, %v1455
      %v1457 = vand.u32 %v251, 4294901760
      %1458 = vmatmul.f32.gmra.mxu0 %v1457
      %v1459 = vpop.f32.mrf.mxu0
      %v1460 = vadd.f32 %v1402, %v1459
      %v1461 = vand.u32 %v254, 4294901760
      %1462 = vmatmul.f32.gmra.mxu0 %v1461
      %v1463 = vpop.f32.mrf.mxu0
      %v1464 = vadd.f32 %v1408, %v1463
      %1465 = vdwg.mxu0
      %1466 = vmatpush.msra.mxu0 0.0
      %1467 = vmatpush.msra.mxu0 0.0
      %1468 = vmatpush.msra.mxu0 0.0
      %1469 = vmatpush.msra.mxu0 0.0
      %1470 = vmatpush.msra.mxu0 0.0
      %1471 = vmatpush.msra.mxu0 0.0
      %1472 = vmatpush.msra.mxu0 0.0
      %v1473 = vand.u32 %v244, 4294901760
      %1474 = vmatpush.msra.mxu0 %v1473
      %v1475 = vand.u32 %v239, 4294901760
      %1476 = vmatpush.msra.mxu0 %v1475
      %v1477 = vand.u32 %v234, 4294901760
      %1478 = vmatpush.msra.mxu0 %v1477
      %v1479 = vand.u32 %v229, 4294901760
      %1480 = vmatpush.msra.mxu0 %v1479
      %v1481 = vand.u32 %v224, 4294901760
      %1482 = vmatpush.msra.mxu0 %v1481
      %v1483 = vand.u32 %v219, 4294901760
      %1484 = vmatpush.msra.mxu0 %v1483
      %v1485 = vand.u32 %v214, 4294901760
      %1486 = vmatpush.msra.mxu0 %v1485
      %v1487 = vand.u32 %v209, 4294901760
      %1488 = vmatpush.msra.mxu0 %v1487
      %v1489 = vand.u32 %v204, 4294901760
      %1490 = vmatpush.msra.mxu0 %v1489
      %v1491 = vand.u32 %v248, 4294901760
      %1492 = vmatmul.f32.gmra.mxu0 %v1491
      %v1493 = vpop.f32.mrf.mxu0
      %v1494 = vadd.f32 %v1456, %v1493
      %v1495 = vand.u32 %v251, 4294901760
      %1496 = vmatmul.f32.gmra.mxu0 %v1495
      %v1497 = vpop.f32.mrf.mxu0
      %v1498 = vadd.f32 %v1460, %v1497
      %v1499 = vand.u32 %v254, 4294901760
      %1500 = vmatmul.f32.gmra.mxu0 %v1499
      %v1501 = vpop.f32.mrf.mxu0
      %v1502 = vadd.f32 %v1464, %v1501
      %1503 = vdwg.mxu0
      %1504 = vmatpush.msra.mxu0 0.0
      %1505 = vmatpush.msra.mxu0 0.0
      %1506 = vmatpush.msra.mxu0 0.0
      %1507 = vmatpush.msra.mxu0 0.0
      %1508 = vmatpush.msra.mxu0 0.0
      %1509 = vmatpush.msra.mxu0 0.0
      %1510 = vmatpush.msra.mxu0 0.0
      %v1511 = vand.u32 %v245, 4294901760
      %1512 = vmatpush.msra.mxu0 %v1511
      %v1513 = vand.u32 %v240, 4294901760
      %1514 = vmatpush.msra.mxu0 %v1513
      %v1515 = vand.u32 %v235, 4294901760
      %1516 = vmatpush.msra.mxu0 %v1515
      %v1517 = vand.u32 %v230, 4294901760
      %1518 = vmatpush.msra.mxu0 %v1517
      %v1519 = vand.u32 %v225, 4294901760
      %1520 = vmatpush.msra.mxu0 %v1519
      %v1521 = vand.u32 %v220, 4294901760
      %1522 = vmatpush.msra.mxu0 %v1521
      %v1523 = vand.u32 %v215, 4294901760
      %1524 = vmatpush.msra.mxu0 %v1523
      %v1525 = vand.u32 %v210, 4294901760
      %1526 = vmatpush.msra.mxu0 %v1525
      %v1527 = vand.u32 %v205, 4294901760
      %1528 = vmatpush.msra.mxu0 %v1527
      %v1529 = vand.u32 %v248, 4294901760
      %v1530 = vsub.f32 %v248, %v1529
      %v1531 = vand.u32 %v1530, 4294901760
      %v1532 = vsub.f32 %v1530, %v1531
      %v1533 = vand.u32 %v1532, 4294901760
      %1534 = vmatmul.f32.gmra.mxu0 %v1533
      %v1535 = vpop.f32.mrf.mxu0
      %v1536 = vadd.f32 0.0, %v1535
      %v1537 = vand.u32 %v251, 4294901760
      %v1538 = vsub.f32 %v251, %v1537
      %v1539 = vand.u32 %v1538, 4294901760
      %v1540 = vsub.f32 %v1538, %v1539
      %v1541 = vand.u32 %v1540, 4294901760
      %1542 = vmatmul.f32.gmra.mxu0 %v1541
      %v1543 = vpop.f32.mrf.mxu0
      %v1544 = vadd.f32 0.0, %v1543
      %v1545 = vand.u32 %v254, 4294901760
      %v1546 = vsub.f32 %v254, %v1545
      %v1547 = vand.u32 %v1546, 4294901760
      %v1548 = vsub.f32 %v1546, %v1547
      %v1549 = vand.u32 %v1548, 4294901760
      %1550 = vmatmul.f32.gmra.mxu0 %v1549
      %v1551 = vpop.f32.mrf.mxu0
      %v1552 = vadd.f32 0.0, %v1551
      %1553 = vdwg.mxu0
      %1554 = vmatpush.msra.mxu0 0.0
      %1555 = vmatpush.msra.mxu0 0.0
      %1556 = vmatpush.msra.mxu0 0.0
      %1557 = vmatpush.msra.mxu0 0.0
      %1558 = vmatpush.msra.mxu0 0.0
      %1559 = vmatpush.msra.mxu0 0.0
      %1560 = vmatpush.msra.mxu0 0.0
      %v1561 = vand.u32 %v245, 4294901760
      %v1562 = vsub.f32 %v245, %v1561
      %v1563 = vand.u32 %v1562, 4294901760
      %v1564 = vsub.f32 %v1562, %v1563
      %v1565 = vand.u32 %v1564, 4294901760
      %1566 = vmatpush.msra.mxu0 %v1565
      %v1567 = vand.u32 %v240, 4294901760
      %v1568 = vsub.f32 %v240, %v1567
      %v1569 = vand.u32 %v1568, 4294901760
      %v1570 = vsub.f32 %v1568, %v1569
      %v1571 = vand.u32 %v1570, 4294901760
      %1572 = vmatpush.msra.mxu0 %v1571
      %v1573 = vand.u32 %v235, 4294901760
      %v1574 = vsub.f32 %v235, %v1573
      %v1575 = vand.u32 %v1574, 4294901760
      %v1576 = vsub.f32 %v1574, %v1575
      %v1577 = vand.u32 %v1576, 4294901760
      %1578 = vmatpush.msra.mxu0 %v1577
      %v1579 = vand.u32 %v230, 4294901760
      %v1580 = vsub.f32 %v230, %v1579
      %v1581 = vand.u32 %v1580, 4294901760
      %v1582 = vsub.f32 %v1580, %v1581
      %v1583 = vand.u32 %v1582, 4294901760
      %1584 = vmatpush.msra.mxu0 %v1583
      %v1585 = vand.u32 %v225, 4294901760
      %v1586 = vsub.f32 %v225, %v1585
      %v1587 = vand.u32 %v1586, 4294901760
      %v1588 = vsub.f32 %v1586, %v1587
      %v1589 = vand.u32 %v1588, 4294901760
      %1590 = vmatpush.msra.mxu0 %v1589
      %v1591 = vand.u32 %v220, 4294901760
      %v1592 = vsub.f32 %v220, %v1591
      %v1593 = vand.u32 %v1592, 4294901760
      %v1594 = vsub.f32 %v1592, %v1593
      %v1595 = vand.u32 %v1594, 4294901760
      %1596 = vmatpush.msra.mxu0 %v1595
      %v1597 = vand.u32 %v215, 4294901760
      %v1598 = vsub.f32 %v215, %v1597
      %v1599 = vand.u32 %v1598, 4294901760
      %v1600 = vsub.f32 %v1598, %v1599
      %v1601 = vand.u32 %v1600, 4294901760
      %1602 = vmatpush.msra.mxu0 %v1601
      %v1603 = vand.u32 %v210, 4294901760
      %v1604 = vsub.f32 %v210, %v1603
      %v1605 = vand.u32 %v1604, 4294901760
      %v1606 = vsub.f32 %v1604, %v1605
      %v1607 = vand.u32 %v1606, 4294901760
      %1608 = vmatpush.msra.mxu0 %v1607
      %v1609 = vand.u32 %v205, 4294901760
      %v1610 = vsub.f32 %v205, %v1609
      %v1611 = vand.u32 %v1610, 4294901760
      %v1612 = vsub.f32 %v1610, %v1611
      %v1613 = vand.u32 %v1612, 4294901760
      %1614 = vmatpush.msra.mxu0 %v1613
      %v1615 = vand.u32 %v248, 4294901760
      %1616 = vmatmul.f32.gmra.mxu0 %v1615
      %v1617 = vpop.f32.mrf.mxu0
      %v1618 = vadd.f32 %v1536, %v1617
      %v1619 = vand.u32 %v251, 4294901760
      %1620 = vmatmul.f32.gmra.mxu0 %v1619
      %v1621 = vpop.f32.mrf.mxu0
      %v1622 = vadd.f32 %v1544, %v1621
      %v1623 = vand.u32 %v254, 4294901760
      %1624 = vmatmul.f32.gmra.mxu0 %v1623
      %v1625 = vpop.f32.mrf.mxu0
      %v1626 = vadd.f32 %v1552, %v1625
      %1627 = vdwg.mxu0
      %1628 = vmatpush.msra.mxu0 0.0
      %1629 = vmatpush.msra.mxu0 0.0
      %1630 = vmatpush.msra.mxu0 0.0
      %1631 = vmatpush.msra.mxu0 0.0
      %1632 = vmatpush.msra.mxu0 0.0
      %1633 = vmatpush.msra.mxu0 0.0
      %1634 = vmatpush.msra.mxu0 0.0
      %v1635 = vand.u32 %v245, 4294901760
      %v1636 = vsub.f32 %v245, %v1635
      %1637 = vmatpush.msra.mxu0 %v1636
      %v1638 = vand.u32 %v240, 4294901760
      %v1639 = vsub.f32 %v240, %v1638
      %1640 = vmatpush.msra.mxu0 %v1639
      %v1641 = vand.u32 %v235, 4294901760
      %v1642 = vsub.f32 %v235, %v1641
      %1643 = vmatpush.msra.mxu0 %v1642
      %v1644 = vand.u32 %v230, 4294901760
      %v1645 = vsub.f32 %v230, %v1644
      %1646 = vmatpush.msra.mxu0 %v1645
      %v1647 = vand.u32 %v225, 4294901760
      %v1648 = vsub.f32 %v225, %v1647
      %1649 = vmatpush.msra.mxu0 %v1648
      %v1650 = vand.u32 %v220, 4294901760
      %v1651 = vsub.f32 %v220, %v1650
      %1652 = vmatpush.msra.mxu0 %v1651
      %v1653 = vand.u32 %v215, 4294901760
      %v1654 = vsub.f32 %v215, %v1653
      %1655 = vmatpush.msra.mxu0 %v1654
      %v1656 = vand.u32 %v210, 4294901760
      %v1657 = vsub.f32 %v210, %v1656
      %1658 = vmatpush.msra.mxu0 %v1657
      %v1659 = vand.u32 %v205, 4294901760
      %v1660 = vsub.f32 %v205, %v1659
      %1661 = vmatpush.msra.mxu0 %v1660
      %v1662 = vand.u32 %v248, 4294901760
      %v1663 = vsub.f32 %v248, %v1662
      %1664 = vmatmul.f32.gmra.mxu0 %v1663
      %v1665 = vpop.f32.mrf.mxu0
      %v1666 = vadd.f32 %v1618, %v1665
      %v1667 = vand.u32 %v251, 4294901760
      %v1668 = vsub.f32 %v251, %v1667
      %1669 = vmatmul.f32.gmra.mxu0 %v1668
      %v1670 = vpop.f32.mrf.mxu0
      %v1671 = vadd.f32 %v1622, %v1670
      %v1672 = vand.u32 %v254, 4294901760
      %v1673 = vsub.f32 %v254, %v1672
      %1674 = vmatmul.f32.gmra.mxu0 %v1673
      %v1675 = vpop.f32.mrf.mxu0
      %v1676 = vadd.f32 %v1626, %v1675
      %1677 = vdwg.mxu0
      %1678 = vmatpush.msra.mxu0 0.0
      %1679 = vmatpush.msra.mxu0 0.0
      %1680 = vmatpush.msra.mxu0 0.0
      %1681 = vmatpush.msra.mxu0 0.0
      %1682 = vmatpush.msra.mxu0 0.0
      %1683 = vmatpush.msra.mxu0 0.0
      %1684 = vmatpush.msra.mxu0 0.0
      %v1685 = vand.u32 %v245, 4294901760
      %1686 = vmatpush.msra.mxu0 %v1685
      %v1687 = vand.u32 %v240, 4294901760
      %1688 = vmatpush.msra.mxu0 %v1687
      %v1689 = vand.u32 %v235, 4294901760
      %1690 = vmatpush.msra.mxu0 %v1689
      %v1691 = vand.u32 %v230, 4294901760
      %1692 = vmatpush.msra.mxu0 %v1691
      %v1693 = vand.u32 %v225, 4294901760
      %1694 = vmatpush.msra.mxu0 %v1693
      %v1695 = vand.u32 %v220, 4294901760
      %1696 = vmatpush.msra.mxu0 %v1695
      %v1697 = vand.u32 %v215, 4294901760
      %1698 = vmatpush.msra.mxu0 %v1697
      %v1699 = vand.u32 %v210, 4294901760
      %1700 = vmatpush.msra.mxu0 %v1699
      %v1701 = vand.u32 %v205, 4294901760
      %1702 = vmatpush.msra.mxu0 %v1701
      %v1703 = vand.u32 %v248, 4294901760
      %v1704 = vsub.f32 %v248, %v1703
      %v1705 = vand.u32 %v1704, 4294901760
      %1706 = vmatmul.f32.gmra.mxu0 %v1705
      %v1707 = vpop.f32.mrf.mxu0
      %v1708 = vadd.f32 %v1666, %v1707
      %v1709 = vand.u32 %v251, 4294901760
      %v1710 = vsub.f32 %v251, %v1709
      %v1711 = vand.u32 %v1710, 4294901760
      %1712 = vmatmul.f32.gmra.mxu0 %v1711
      %v1713 = vpop.f32.mrf.mxu0
      %v1714 = vadd.f32 %v1671, %v1713
      %v1715 = vand.u32 %v254, 4294901760
      %v1716 = vsub.f32 %v254, %v1715
      %v1717 = vand.u32 %v1716, 4294901760
      %1718 = vmatmul.f32.gmra.mxu0 %v1717
      %v1719 = vpop.f32.mrf.mxu0
      %v1720 = vadd.f32 %v1676, %v1719
      %1721 = vdwg.mxu0
      %1722 = vmatpush.msra.mxu0 0.0
      %1723 = vmatpush.msra.mxu0 0.0
      %1724 = vmatpush.msra.mxu0 0.0
      %1725 = vmatpush.msra.mxu0 0.0
      %1726 = vmatpush.msra.mxu0 0.0
      %1727 = vmatpush.msra.mxu0 0.0
      %1728 = vmatpush.msra.mxu0 0.0
      %v1729 = vand.u32 %v245, 4294901760
      %v1730 = vsub.f32 %v245, %v1729
      %v1731 = vand.u32 %v1730, 4294901760
      %1732 = vmatpush.msra.mxu0 %v1731
      %v1733 = vand.u32 %v240, 4294901760
      %v1734 = vsub.f32 %v240, %v1733
      %v1735 = vand.u32 %v1734, 4294901760
      %1736 = vmatpush.msra.mxu0 %v1735
      %v1737 = vand.u32 %v235, 4294901760
      %v1738 = vsub.f32 %v235, %v1737
      %v1739 = vand.u32 %v1738, 4294901760
      %1740 = vmatpush.msra.mxu0 %v1739
      %v1741 = vand.u32 %v230, 4294901760
      %v1742 = vsub.f32 %v230, %v1741
      %v1743 = vand.u32 %v1742, 4294901760
      %1744 = vmatpush.msra.mxu0 %v1743
      %v1745 = vand.u32 %v225, 4294901760
      %v1746 = vsub.f32 %v225, %v1745
      %v1747 = vand.u32 %v1746, 4294901760
      %1748 = vmatpush.msra.mxu0 %v1747
      %v1749 = vand.u32 %v220, 4294901760
      %v1750 = vsub.f32 %v220, %v1749
      %v1751 = vand.u32 %v1750, 4294901760
      %1752 = vmatpush.msra.mxu0 %v1751
      %v1753 = vand.u32 %v215, 4294901760
      %v1754 = vsub.f32 %v215, %v1753
      %v1755 = vand.u32 %v1754, 4294901760
      %1756 = vmatpush.msra.mxu0 %v1755
      %v1757 = vand.u32 %v210, 4294901760
      %v1758 = vsub.f32 %v210, %v1757
      %v1759 = vand.u32 %v1758, 4294901760
      %1760 = vmatpush.msra.mxu0 %v1759
      %v1761 = vand.u32 %v205, 4294901760
      %v1762 = vsub.f32 %v205, %v1761
      %v1763 = vand.u32 %v1762, 4294901760
      %1764 = vmatpush.msra.mxu0 %v1763
      %v1765 = vand.u32 %v248, 4294901760
      %1766 = vmatmul.f32.gmra.mxu0 %v1765
      %v1767 = vpop.f32.mrf.mxu0
      %v1768 = vadd.f32 %v1708, %v1767
      %v1769 = vand.u32 %v251, 4294901760
      %1770 = vmatmul.f32.gmra.mxu0 %v1769
      %v1771 = vpop.f32.mrf.mxu0
      %v1772 = vadd.f32 %v1714, %v1771
      %v1773 = vand.u32 %v254, 4294901760
      %1774 = vmatmul.f32.gmra.mxu0 %v1773
      %v1775 = vpop.f32.mrf.mxu0
      %v1776 = vadd.f32 %v1720, %v1775
      %1777 = vdwg.mxu0
      %1778 = vmatpush.msra.mxu0 0.0
      %1779 = vmatpush.msra.mxu0 0.0
      %1780 = vmatpush.msra.mxu0 0.0
      %1781 = vmatpush.msra.mxu0 0.0
      %1782 = vmatpush.msra.mxu0 0.0
      %1783 = vmatpush.msra.mxu0 0.0
      %1784 = vmatpush.msra.mxu0 0.0
      %v1785 = vand.u32 %v245, 4294901760
      %1786 = vmatpush.msra.mxu0 %v1785
      %v1787 = vand.u32 %v240, 4294901760
      %1788 = vmatpush.msra.mxu0 %v1787
      %v1789 = vand.u32 %v235, 4294901760
      %1790 = vmatpush.msra.mxu0 %v1789
      %v1791 = vand.u32 %v230, 4294901760
      %1792 = vmatpush.msra.mxu0 %v1791
      %v1793 = vand.u32 %v225, 4294901760
      %1794 = vmatpush.msra.mxu0 %v1793
      %v1795 = vand.u32 %v220, 4294901760
      %1796 = vmatpush.msra.mxu0 %v1795
      %v1797 = vand.u32 %v215, 4294901760
      %1798 = vmatpush.msra.mxu0 %v1797
      %v1799 = vand.u32 %v210, 4294901760
      %1800 = vmatpush.msra.mxu0 %v1799
      %v1801 = vand.u32 %v205, 4294901760
      %1802 = vmatpush.msra.mxu0 %v1801
      %v1803 = vand.u32 %v248, 4294901760
      %1804 = vmatmul.f32.gmra.mxu0 %v1803
      %v1805 = vpop.f32.mrf.mxu0
      %v1806 = vadd.f32 %v1768, %v1805
      %v1807 = vand.u32 %v251, 4294901760
      %1808 = vmatmul.f32.gmra.mxu0 %v1807
      %v1809 = vpop.f32.mrf.mxu0
      %v1810 = vadd.f32 %v1772, %v1809
      %v1811 = vand.u32 %v254, 4294901760
      %1812 = vmatmul.f32.gmra.mxu0 %v1811
      %v1813 = vpop.f32.mrf.mxu0
      %v1814 = vadd.f32 %v1776, %v1813
      %1815 = vdwg.mxu0
      %v1816 = vld [vmem:[%s2] ss:$8 sm:$0xf]
      %v1818 = vperm.slane %v1816, 0
      %v1819 = vperm.slane %v1816, 1
      %v1820 = vperm.slane %v1816, 2
      %v1821 = vperm.slane %v1816, 3
      %v1826 = vmul.f32 %v558, %v1818
      %v1827 = vmul.f32 %v870, %v1819
      %v1828 = vmul.f32 %v1182, %v1820
      %v1829 = vmul.f32 %v1494, %v1821
      %v1830 = vmul.f32 %v562, %v1818
      %v1831 = vmul.f32 %v874, %v1819
      %v1832 = vmul.f32 %v1186, %v1820
      %v1833 = vmul.f32 %v1498, %v1821
      %v1834 = vadd.f32 %v1826, 0.0
      %v1835 = vadd.f32 %v1827, 0.0
      %v1836 = vadd.f32 %v1828, 0.0
      %v1837 = vadd.f32 %v1829, 0.0
      %v1838 = vadd.f32 %v1830, 0.0
      %v1839 = vadd.f32 %v1831, 0.0
      %v1840 = vadd.f32 %v1832, 0.0
      %v1841 = vadd.f32 %v1833, 0.0
      %s1842 = scalar_lea.vmem %s2, 1
      %v1843 = vld [vmem:[%s1842] ss:$8 sm:$0xf]
      %v1845 = vperm.slane %v1843, 0
      %v1846 = vperm.slane %v1843, 1
      %v1847 = vperm.slane %v1843, 2
      %v1848 = vperm.slane %v1843, 3
      %1849 = vrot.lane.b32.xlu0 %v1845, 32
      %v1850 = vpop.permute.xlu0 %1849
      %1851 = vrot.lane.b32.xlu0 %v1846, 32
      %v1852 = vpop.permute.xlu0 %1851
      %1853 = vrot.lane.b32.xlu0 %v1847, 32
      %v1854 = vpop.permute.xlu0 %1853
      %1855 = vrot.lane.b32.xlu0 %v1848, 32
      %v1856 = vpop.permute.xlu0 %1855
      %vm1857 = vcmask 261120
      %v1858 = vsel %vm1857, %v1850, %v1852
      %v1859 = vsel %vm1857, %v1852, %v1854
      %v1860 = vsel %vm1857, %v1854, %v1856
      %v1866 = vmul.f32 %v558, %v1850
      %v1867 = vmul.f32 %v870, %v1858
      %v1868 = vmul.f32 %v1182, %v1859
      %v1869 = vmul.f32 %v1494, %v1860
      %v1870 = vmul.f32 %v1806, %v1856
      %v1871 = vmul.f32 %v562, %v1850
      %v1872 = vmul.f32 %v874, %v1858
      %v1873 = vmul.f32 %v1186, %v1859
      %v1874 = vmul.f32 %v1498, %v1860
      %v1875 = vmul.f32 %v1810, %v1856
      %1886 = vrot.lane.b32.xlu0 %v1866, 96
      %v1887 = vpop.permute.xlu0 %1886
      %1888 = vrot.lane.b32.xlu0 %v1867, 96
      %v1889 = vpop.permute.xlu0 %1888
      %1890 = vrot.lane.b32.xlu0 %v1868, 96
      %v1891 = vpop.permute.xlu0 %1890
      %1892 = vrot.lane.b32.xlu0 %v1869, 96
      %v1893 = vpop.permute.xlu0 %1892
      %1894 = vrot.lane.b32.xlu0 %v1870, 96
      %v1895 = vpop.permute.xlu0 %1894
      %1896 = vrot.lane.b32.xlu0 %v1871, 96
      %v1897 = vpop.permute.xlu0 %1896
      %1898 = vrot.lane.b32.xlu0 %v1872, 96
      %v1899 = vpop.permute.xlu0 %1898
      %1900 = vrot.lane.b32.xlu0 %v1873, 96
      %v1901 = vpop.permute.xlu0 %1900
      %1902 = vrot.lane.b32.xlu0 %v1874, 96
      %v1903 = vpop.permute.xlu0 %1902
      %1904 = vrot.lane.b32.xlu0 %v1875, 96
      %v1905 = vpop.permute.xlu0 %1904
      %vm1906 = vcmask 785408
      %v1907 = vsel %vm1906, %v1887, %v1889
      %v1908 = vsel %vm1906, %v1889, %v1891
      %v1909 = vsel %vm1906, %v1891, %v1893
      %v1910 = vsel %vm1906, %v1893, %v1895
      %v1911 = vsel %vm1906, %v1897, %v1899
      %v1912 = vsel %vm1906, %v1899, %v1901
      %v1913 = vsel %vm1906, %v1901, %v1903
      %v1914 = vsel %vm1906, %v1903, %v1905
      %v1923 = vadd.f32 %v1834, %v1907
      %v1924 = vadd.f32 %v1835, %v1908
      %v1925 = vadd.f32 %v1836, %v1909
      %v1926 = vadd.f32 %v1837, %v1910
      %v1927 = vadd.f32 %v1838, %v1911
      %v1928 = vadd.f32 %v1839, %v1912
      %v1929 = vadd.f32 %v1840, %v1913
      %v1930 = vadd.f32 %v1841, %v1914
      %s1931 = scalar_lea.vmem %s2, 2
      %v1932 = vld [vmem:[%s1931] ss:$8 sm:$0xf]
      %v1934 = vperm.slane %v1932, 0
      %v1935 = vperm.slane %v1932, 1
      %v1936 = vperm.slane %v1932, 2
      %v1937 = vperm.slane %v1932, 3
      %1938 = vrot.lane.b32.xlu0 %v1934, 64
      %v1939 = vpop.permute.xlu0 %1938
      %1940 = vrot.lane.b32.xlu0 %v1935, 64
      %v1941 = vpop.permute.xlu0 %1940
      %1942 = vrot.lane.b32.xlu0 %v1936, 64
      %v1943 = vpop.permute.xlu0 %1942
      %1944 = vrot.lane.b32.xlu0 %v1937, 64
      %v1945 = vpop.permute.xlu0 %1944
      %vm1946 = vcmask 523264
      %v1947 = vsel %vm1946, %v1939, %v1941
      %v1948 = vsel %vm1946, %v1941, %v1943
      %v1949 = vsel %vm1946, %v1943, %v1945
      %v1955 = vmul.f32 %v558, %v1939
      %v1956 = vmul.f32 %v870, %v1947
      %v1957 = vmul.f32 %v1182, %v1948
      %v1958 = vmul.f32 %v1494, %v1949
      %v1959 = vmul.f32 %v1806, %v1945
      %v1960 = vmul.f32 %v562, %v1939
      %v1961 = vmul.f32 %v874, %v1947
      %v1962 = vmul.f32 %v1186, %v1948
      %v1963 = vmul.f32 %v1498, %v1949
      %v1964 = vmul.f32 %v1810, %v1945
      %1975 = vrot.lane.b32.xlu0 %v1955, 64
      %v1976 = vpop.permute.xlu0 %1975
      %1977 = vrot.lane.b32.xlu0 %v1956, 64
      %v1978 = vpop.permute.xlu0 %1977
      %1979 = vrot.lane.b32.xlu0 %v1957, 64
      %v1980 = vpop.permute.xlu0 %1979
      %1981 = vrot.lane.b32.xlu0 %v1958, 64
      %v1982 = vpop.permute.xlu0 %1981
      %1983 = vrot.lane.b32.xlu0 %v1959, 64
      %v1984 = vpop.permute.xlu0 %1983
      %1985 = vrot.lane.b32.xlu0 %v1960, 64
      %v1986 = vpop.permute.xlu0 %1985
      %1987 = vrot.lane.b32.xlu0 %v1961, 64
      %v1988 = vpop.permute.xlu0 %1987
      %1989 = vrot.lane.b32.xlu0 %v1962, 64
      %v1990 = vpop.permute.xlu0 %1989
      %1991 = vrot.lane.b32.xlu0 %v1963, 64
      %v1992 = vpop.permute.xlu0 %1991
      %1993 = vrot.lane.b32.xlu0 %v1964, 64
      %v1994 = vpop.permute.xlu0 %1993
      %v1995 = vsel %vm1946, %v1976, %v1978
      %v1996 = vsel %vm1946, %v1978, %v1980
      %v1997 = vsel %vm1946, %v1980, %v1982
      %v1998 = vsel %vm1946, %v1982, %v1984
      %v1999 = vsel %vm1946, %v1986, %v1988
      %v2000 = vsel %vm1946, %v1988, %v1990
      %v2001 = vsel %vm1946, %v1990, %v1992
      %v2002 = vsel %vm1946, %v1992, %v1994
      %v2011 = vadd.f32 %v1923, %v1995
      %v2012 = vadd.f32 %v1924, %v1996
      %v2013 = vadd.f32 %v1925, %v1997
      %v2014 = vadd.f32 %v1926, %v1998
      %v2015 = vadd.f32 %v1927, %v1999
      %v2016 = vadd.f32 %v1928, %v2000
      %v2017 = vadd.f32 %v1929, %v2001
      %v2018 = vadd.f32 %v1930, %v2002
      %s2019 = scalar_lea.vmem %s2, 3
      %v2020 = vld [vmem:[%s2019] ss:$8 sm:$0xf]
      %v2022 = vperm.slane %v2020, 0
      %v2023 = vperm.slane %v2020, 1
      %v2024 = vperm.slane %v2020, 2
      %v2025 = vperm.slane %v2020, 3
      %v2030 = vmul.f32 %v558, %v2022
      %v2031 = vmul.f32 %v870, %v2023
      %v2032 = vmul.f32 %v1182, %v2024
      %v2033 = vmul.f32 %v1494, %v2025
      %v2034 = vmul.f32 %v562, %v2022
      %v2035 = vmul.f32 %v874, %v2023
      %v2036 = vmul.f32 %v1186, %v2024
      %v2037 = vmul.f32 %v1498, %v2025
      %v2038 = vmul.f32 %v566, %v2022
      %v2039 = vmul.f32 %v878, %v2023
      %v2040 = vmul.f32 %v1190, %v2024
      %v2041 = vmul.f32 %v1502, %v2025
      %vm2054 = vcmask 1046528
      %v2055 = vrot.slane %v2030, 1
      %v2056 = vrot.slane %v2034, 1
      %v2057 = vsel %vm2054, %v2055, %v2056
      %v2058 = vrot.slane %v2031, 1
      %v2059 = vrot.slane %v2035, 1
      %v2060 = vsel %vm2054, %v2058, %v2059
      %v2061 = vrot.slane %v2032, 1
      %v2062 = vrot.slane %v2036, 1
      %v2063 = vsel %vm2054, %v2061, %v2062
      %v2064 = vrot.slane %v2033, 1
      %v2065 = vrot.slane %v2037, 1
      %v2066 = vsel %vm2054, %v2064, %v2065
      %v2067 = vrot.slane %v2038, 1
      %v2068 = vsel %vm2054, %v2056, %v2067
      %v2069 = vrot.slane %v2039, 1
      %v2070 = vsel %vm2054, %v2059, %v2069
      %v2071 = vrot.slane %v2040, 1
      %v2072 = vsel %vm2054, %v2062, %v2071
      %v2073 = vrot.slane %v2041, 1
      %v2074 = vsel %vm2054, %v2065, %v2073
      %v2083 = vadd.f32 %v2011, %v2057
      %v2084 = vadd.f32 %v2012, %v2060
      %v2085 = vadd.f32 %v2013, %v2063
      %v2086 = vadd.f32 %v2014, %v2066
      %v2087 = vadd.f32 %v2015, %v2068
      %v2088 = vadd.f32 %v2016, %v2070
      %v2089 = vadd.f32 %v2017, %v2072
      %v2090 = vadd.f32 %v2018, %v2074
      %s2091 = scalar_lea.vmem %s2, 4
      %v2092 = vld [vmem:[%s2091] ss:$8 sm:$0xf]
      %v2094 = vperm.slane %v2092, 0
      %v2095 = vperm.slane %v2092, 1
      %v2096 = vperm.slane %v2092, 2
      %v2097 = vperm.slane %v2092, 3
      %2098 = vrot.lane.b32.xlu0 %v2094, 32
      %v2099 = vpop.permute.xlu0 %2098
      %2100 = vrot.lane.b32.xlu0 %v2095, 32
      %v2101 = vpop.permute.xlu0 %2100
      %2102 = vrot.lane.b32.xlu0 %v2096, 32
      %v2103 = vpop.permute.xlu0 %2102
      %2104 = vrot.lane.b32.xlu0 %v2097, 32
      %v2105 = vpop.permute.xlu0 %2104
      %v2106 = vsel %vm1857, %v2099, %v2101
      %v2107 = vsel %vm1857, %v2101, %v2103
      %v2108 = vsel %vm1857, %v2103, %v2105
      %v2114 = vmul.f32 %v558, %v2099
      %v2115 = vmul.f32 %v870, %v2106
      %v2116 = vmul.f32 %v1182, %v2107
      %v2117 = vmul.f32 %v1494, %v2108
      %v2118 = vmul.f32 %v1806, %v2105
      %v2119 = vmul.f32 %v562, %v2099
      %v2120 = vmul.f32 %v874, %v2106
      %v2121 = vmul.f32 %v1186, %v2107
      %v2122 = vmul.f32 %v1498, %v2108
      %v2123 = vmul.f32 %v1810, %v2105
      %v2124 = vmul.f32 %v566, %v2099
      %v2125 = vmul.f32 %v878, %v2106
      %v2126 = vmul.f32 %v1190, %v2107
      %v2127 = vmul.f32 %v1502, %v2108
      %v2128 = vmul.f32 %v1814, %v2105
      %v2144 = vrot.slane %v2114, 1
      %v2145 = vrot.slane %v2119, 1
      %v2146 = vsel %vm2054, %v2144, %v2145
      %v2147 = vrot.slane %v2115, 1
      %v2148 = vrot.slane %v2120, 1
      %v2149 = vsel %vm2054, %v2147, %v2148
      %v2150 = vrot.slane %v2116, 1
      %v2151 = vrot.slane %v2121, 1
      %v2152 = vsel %vm2054, %v2150, %v2151
      %v2153 = vrot.slane %v2117, 1
      %v2154 = vrot.slane %v2122, 1
      %v2155 = vsel %vm2054, %v2153, %v2154
      %v2156 = vrot.slane %v2118, 1
      %v2157 = vrot.slane %v2123, 1
      %v2158 = vsel %vm2054, %v2156, %v2157
      %v2159 = vrot.slane %v2124, 1
      %v2160 = vsel %vm2054, %v2145, %v2159
      %v2161 = vrot.slane %v2125, 1
      %v2162 = vsel %vm2054, %v2148, %v2161
      %v2163 = vrot.slane %v2126, 1
      %v2164 = vsel %vm2054, %v2151, %v2163
      %v2165 = vrot.slane %v2127, 1
      %v2166 = vsel %vm2054, %v2154, %v2165
      %v2167 = vrot.slane %v2128, 1
      %v2168 = vsel %vm2054, %v2157, %v2167
      %2169 = vrot.lane.b32.xlu0 %v2146, 96
      %v2170 = vpop.permute.xlu0 %2169
      %2171 = vrot.lane.b32.xlu0 %v2149, 96
      %v2172 = vpop.permute.xlu0 %2171
      %2173 = vrot.lane.b32.xlu0 %v2152, 96
      %v2174 = vpop.permute.xlu0 %2173
      %2175 = vrot.lane.b32.xlu0 %v2155, 96
      %v2176 = vpop.permute.xlu0 %2175
      %2177 = vrot.lane.b32.xlu0 %v2158, 96
      %v2178 = vpop.permute.xlu0 %2177
      %2179 = vrot.lane.b32.xlu0 %v2160, 96
      %v2180 = vpop.permute.xlu0 %2179
      %2181 = vrot.lane.b32.xlu0 %v2162, 96
      %v2182 = vpop.permute.xlu0 %2181
      %2183 = vrot.lane.b32.xlu0 %v2164, 96
      %v2184 = vpop.permute.xlu0 %2183
      %2185 = vrot.lane.b32.xlu0 %v2166, 96
      %v2186 = vpop.permute.xlu0 %2185
      %2187 = vrot.lane.b32.xlu0 %v2168, 96
      %v2188 = vpop.permute.xlu0 %2187
      %v2189 = vsel %vm1906, %v2170, %v2172
      %v2190 = vsel %vm1906, %v2172, %v2174
      %v2191 = vsel %vm1906, %v2174, %v2176
      %v2192 = vsel %vm1906, %v2176, %v2178
      %v2193 = vsel %vm1906, %v2180, %v2182
      %v2194 = vsel %vm1906, %v2182, %v2184
      %v2195 = vsel %vm1906, %v2184, %v2186
      %v2196 = vsel %vm1906, %v2186, %v2188
      %v2205 = vadd.f32 %v2083, %v2189
      %v2206 = vadd.f32 %v2084, %v2190
      %v2207 = vadd.f32 %v2085, %v2191
      %v2208 = vadd.f32 %v2086, %v2192
      %v2209 = vadd.f32 %v2087, %v2193
      %v2210 = vadd.f32 %v2088, %v2194
      %v2211 = vadd.f32 %v2089, %v2195
      %v2212 = vadd.f32 %v2090, %v2196
      %s2213 = scalar_lea.vmem %s2, 5
      %v2214 = vld [vmem:[%s2213] ss:$8 sm:$0xf]
      %v2216 = vperm.slane %v2214, 0
      %v2217 = vperm.slane %v2214, 1
      %v2218 = vperm.slane %v2214, 2
      %v2219 = vperm.slane %v2214, 3
      %2220 = vrot.lane.b32.xlu0 %v2216, 64
      %v2221 = vpop.permute.xlu0 %2220
      %2222 = vrot.lane.b32.xlu0 %v2217, 64
      %v2223 = vpop.permute.xlu0 %2222
      %2224 = vrot.lane.b32.xlu0 %v2218, 64
      %v2225 = vpop.permute.xlu0 %2224
      %2226 = vrot.lane.b32.xlu0 %v2219, 64
      %v2227 = vpop.permute.xlu0 %2226
      %v2228 = vsel %vm1946, %v2221, %v2223
      %v2229 = vsel %vm1946, %v2223, %v2225
      %v2230 = vsel %vm1946, %v2225, %v2227
      %v2236 = vmul.f32 %v558, %v2221
      %v2237 = vmul.f32 %v870, %v2228
      %v2238 = vmul.f32 %v1182, %v2229
      %v2239 = vmul.f32 %v1494, %v2230
      %v2240 = vmul.f32 %v1806, %v2227
      %v2241 = vmul.f32 %v562, %v2221
      %v2242 = vmul.f32 %v874, %v2228
      %v2243 = vmul.f32 %v1186, %v2229
      %v2244 = vmul.f32 %v1498, %v2230
      %v2245 = vmul.f32 %v1810, %v2227
      %v2246 = vmul.f32 %v566, %v2221
      %v2247 = vmul.f32 %v878, %v2228
      %v2248 = vmul.f32 %v1190, %v2229
      %v2249 = vmul.f32 %v1502, %v2230
      %v2250 = vmul.f32 %v1814, %v2227
      %v2266 = vrot.slane %v2236, 1
      %v2267 = vrot.slane %v2241, 1
      %v2268 = vsel %vm2054, %v2266, %v2267
      %v2269 = vrot.slane %v2237, 1
      %v2270 = vrot.slane %v2242, 1
      %v2271 = vsel %vm2054, %v2269, %v2270
      %v2272 = vrot.slane %v2238, 1
      %v2273 = vrot.slane %v2243, 1
      %v2274 = vsel %vm2054, %v2272, %v2273
      %v2275 = vrot.slane %v2239, 1
      %v2276 = vrot.slane %v2244, 1
      %v2277 = vsel %vm2054, %v2275, %v2276
      %v2278 = vrot.slane %v2240, 1
      %v2279 = vrot.slane %v2245, 1
      %v2280 = vsel %vm2054, %v2278, %v2279
      %v2281 = vrot.slane %v2246, 1
      %v2282 = vsel %vm2054, %v2267, %v2281
      %v2283 = vrot.slane %v2247, 1
      %v2284 = vsel %vm2054, %v2270, %v2283
      %v2285 = vrot.slane %v2248, 1
      %v2286 = vsel %vm2054, %v2273, %v2285
      %v2287 = vrot.slane %v2249, 1
      %v2288 = vsel %vm2054, %v2276, %v2287
      %v2289 = vrot.slane %v2250, 1
      %v2290 = vsel %vm2054, %v2279, %v2289
      %2291 = vrot.lane.b32.xlu0 %v2268, 64
      %v2292 = vpop.permute.xlu0 %2291
      %2293 = vrot.lane.b32.xlu0 %v2271, 64
      %v2294 = vpop.permute.xlu0 %2293
      %2295 = vrot.lane.b32.xlu0 %v2274, 64
      %v2296 = vpop.permute.xlu0 %2295
      %2297 = vrot.lane.b32.xlu0 %v2277, 64
      %v2298 = vpop.permute.xlu0 %2297
      %2299 = vrot.lane.b32.xlu0 %v2280, 64
      %v2300 = vpop.permute.xlu0 %2299
      %2301 = vrot.lane.b32.xlu0 %v2282, 64
      %v2302 = vpop.permute.xlu0 %2301
      %2303 = vrot.lane.b32.xlu0 %v2284, 64
      %v2304 = vpop.permute.xlu0 %2303
      %2305 = vrot.lane.b32.xlu0 %v2286, 64
      %v2306 = vpop.permute.xlu0 %2305
      %2307 = vrot.lane.b32.xlu0 %v2288, 64
      %v2308 = vpop.permute.xlu0 %2307
      %2309 = vrot.lane.b32.xlu0 %v2290, 64
      %v2310 = vpop.permute.xlu0 %2309
      %v2311 = vsel %vm1946, %v2292, %v2294
      %v2312 = vsel %vm1946, %v2294, %v2296
      %v2313 = vsel %vm1946, %v2296, %v2298
      %v2314 = vsel %vm1946, %v2298, %v2300
      %v2315 = vsel %vm1946, %v2302, %v2304
      %v2316 = vsel %vm1946, %v2304, %v2306
      %v2317 = vsel %vm1946, %v2306, %v2308
      %v2318 = vsel %vm1946, %v2308, %v2310
      %v2327 = vadd.f32 %v2205, %v2311
      %v2328 = vadd.f32 %v2206, %v2312
      %v2329 = vadd.f32 %v2207, %v2313
      %v2330 = vadd.f32 %v2208, %v2314
      %v2331 = vadd.f32 %v2209, %v2315
      %v2332 = vadd.f32 %v2210, %v2316
      %v2333 = vadd.f32 %v2211, %v2317
      %v2334 = vadd.f32 %v2212, %v2318
      %s2335 = scalar_lea.vmem %s2, 6
      %v2336 = vld [vmem:[%s2335] ss:$8 sm:$0xf]
      %v2338 = vperm.slane %v2336, 0
      %v2339 = vperm.slane %v2336, 1
      %v2340 = vperm.slane %v2336, 2
      %v2341 = vperm.slane %v2336, 3
      %v2346 = vmul.f32 %v558, %v2338
      %v2347 = vmul.f32 %v870, %v2339
      %v2348 = vmul.f32 %v1182, %v2340
      %v2349 = vmul.f32 %v1494, %v2341
      %v2350 = vmul.f32 %v562, %v2338
      %v2351 = vmul.f32 %v874, %v2339
      %v2352 = vmul.f32 %v1186, %v2340
      %v2353 = vmul.f32 %v1498, %v2341
      %v2354 = vmul.f32 %v566, %v2338
      %v2355 = vmul.f32 %v878, %v2339
      %v2356 = vmul.f32 %v1190, %v2340
      %v2357 = vmul.f32 %v1502, %v2341
      %vm2370 = vcmask 1045504
      %v2371 = vrot.slane %v2346, 2
      %v2372 = vrot.slane %v2350, 2
      %v2373 = vsel %vm2370, %v2371, %v2372
      %v2374 = vrot.slane %v2347, 2
      %v2375 = vrot.slane %v2351, 2
      %v2376 = vsel %vm2370, %v2374, %v2375
      %v2377 = vrot.slane %v2348, 2
      %v2378 = vrot.slane %v2352, 2
      %v2379 = vsel %vm2370, %v2377, %v2378
      %v2380 = vrot.slane %v2349, 2
      %v2381 = vrot.slane %v2353, 2
      %v2382 = vsel %vm2370, %v2380, %v2381
      %v2383 = vrot.slane %v2354, 2
      %v2384 = vsel %vm2370, %v2372, %v2383
      %v2385 = vrot.slane %v2355, 2
      %v2386 = vsel %vm2370, %v2375, %v2385
      %v2387 = vrot.slane %v2356, 2
      %v2388 = vsel %vm2370, %v2378, %v2387
      %v2389 = vrot.slane %v2357, 2
      %v2390 = vsel %vm2370, %v2381, %v2389
      %v2399 = vadd.f32 %v2327, %v2373
      %v2400 = vadd.f32 %v2328, %v2376
      %v2401 = vadd.f32 %v2329, %v2379
      %v2402 = vadd.f32 %v2330, %v2382
      %v2403 = vadd.f32 %v2331, %v2384
      %v2404 = vadd.f32 %v2332, %v2386
      %v2405 = vadd.f32 %v2333, %v2388
      %v2406 = vadd.f32 %v2334, %v2390
      %s2407 = scalar_lea.vmem %s2, 7
      %v2408 = vld [vmem:[%s2407] ss:$8 sm:$0xf]
      %v2410 = vperm.slane %v2408, 0
      %v2411 = vperm.slane %v2408, 1
      %v2412 = vperm.slane %v2408, 2
      %v2413 = vperm.slane %v2408, 3
      %2414 = vrot.lane.b32.xlu0 %v2410, 32
      %v2415 = vpop.permute.xlu0 %2414
      %2416 = vrot.lane.b32.xlu0 %v2411, 32
      %v2417 = vpop.permute.xlu0 %2416
      %2418 = vrot.lane.b32.xlu0 %v2412, 32
      %v2419 = vpop.permute.xlu0 %2418
      %2420 = vrot.lane.b32.xlu0 %v2413, 32
      %v2421 = vpop.permute.xlu0 %2420
      %v2422 = vsel %vm1857, %v2415, %v2417
      %v2423 = vsel %vm1857, %v2417, %v2419
      %v2424 = vsel %vm1857, %v2419, %v2421
      %v2430 = vmul.f32 %v558, %v2415
      %v2431 = vmul.f32 %v870, %v2422
      %v2432 = vmul.f32 %v1182, %v2423
      %v2433 = vmul.f32 %v1494, %v2424
      %v2434 = vmul.f32 %v1806, %v2421
      %v2435 = vmul.f32 %v562, %v2415
      %v2436 = vmul.f32 %v874, %v2422
      %v2437 = vmul.f32 %v1186, %v2423
      %v2438 = vmul.f32 %v1498, %v2424
      %v2439 = vmul.f32 %v1810, %v2421
      %v2440 = vmul.f32 %v566, %v2415
      %v2441 = vmul.f32 %v878, %v2422
      %v2442 = vmul.f32 %v1190, %v2423
      %v2443 = vmul.f32 %v1502, %v2424
      %v2444 = vmul.f32 %v1814, %v2421
      %v2460 = vrot.slane %v2430, 2
      %v2461 = vrot.slane %v2435, 2
      %v2462 = vsel %vm2370, %v2460, %v2461
      %v2463 = vrot.slane %v2431, 2
      %v2464 = vrot.slane %v2436, 2
      %v2465 = vsel %vm2370, %v2463, %v2464
      %v2466 = vrot.slane %v2432, 2
      %v2467 = vrot.slane %v2437, 2
      %v2468 = vsel %vm2370, %v2466, %v2467
      %v2469 = vrot.slane %v2433, 2
      %v2470 = vrot.slane %v2438, 2
      %v2471 = vsel %vm2370, %v2469, %v2470
      %v2472 = vrot.slane %v2434, 2
      %v2473 = vrot.slane %v2439, 2
      %v2474 = vsel %vm2370, %v2472, %v2473
      %v2475 = vrot.slane %v2440, 2
      %v2476 = vsel %vm2370, %v2461, %v2475
      %v2477 = vrot.slane %v2441, 2
      %v2478 = vsel %vm2370, %v2464, %v2477
      %v2479 = vrot.slane %v2442, 2
      %v2480 = vsel %vm2370, %v2467, %v2479
      %v2481 = vrot.slane %v2443, 2
      %v2482 = vsel %vm2370, %v2470, %v2481
      %v2483 = vrot.slane %v2444, 2
      %v2484 = vsel %vm2370, %v2473, %v2483
      %2485 = vrot.lane.b32.xlu0 %v2462, 96
      %v2486 = vpop.permute.xlu0 %2485
      %2487 = vrot.lane.b32.xlu0 %v2465, 96
      %v2488 = vpop.permute.xlu0 %2487
      %2489 = vrot.lane.b32.xlu0 %v2468, 96
      %v2490 = vpop.permute.xlu0 %2489
      %2491 = vrot.lane.b32.xlu0 %v2471, 96
      %v2492 = vpop.permute.xlu0 %2491
      %2493 = vrot.lane.b32.xlu0 %v2474, 96
      %v2494 = vpop.permute.xlu0 %2493
      %2495 = vrot.lane.b32.xlu0 %v2476, 96
      %v2496 = vpop.permute.xlu0 %2495
      %2497 = vrot.lane.b32.xlu0 %v2478, 96
      %v2498 = vpop.permute.xlu0 %2497
      %2499 = vrot.lane.b32.xlu0 %v2480, 96
      %v2500 = vpop.permute.xlu0 %2499
      %2501 = vrot.lane.b32.xlu0 %v2482, 96
      %v2502 = vpop.permute.xlu0 %2501
      %2503 = vrot.lane.b32.xlu0 %v2484, 96
      %v2504 = vpop.permute.xlu0 %2503
      %v2505 = vsel %vm1906, %v2486, %v2488
      %v2506 = vsel %vm1906, %v2488, %v2490
      %v2507 = vsel %vm1906, %v2490, %v2492
      %v2508 = vsel %vm1906, %v2492, %v2494
      %v2509 = vsel %vm1906, %v2496, %v2498
      %v2510 = vsel %vm1906, %v2498, %v2500
      %v2511 = vsel %vm1906, %v2500, %v2502
      %v2512 = vsel %vm1906, %v2502, %v2504
      %v2521 = vadd.f32 %v2399, %v2505
      %v2522 = vadd.f32 %v2400, %v2506
      %v2523 = vadd.f32 %v2401, %v2507
      %v2524 = vadd.f32 %v2402, %v2508
      %v2525 = vadd.f32 %v2403, %v2509
      %v2526 = vadd.f32 %v2404, %v2510
      %v2527 = vadd.f32 %v2405, %v2511
      %v2528 = vadd.f32 %v2406, %v2512
      %s2529 = scalar_lea.vmem %s2, 32
      %v2530 = vld [vmem:[%s2529] ss:$8 sm:$0xf]
      %v2532 = vperm.slane %v2530, 0
      %v2533 = vperm.slane %v2530, 1
      %v2534 = vperm.slane %v2530, 2
      %v2535 = vperm.slane %v2530, 3
      %2536 = vrot.lane.b32.xlu0 %v2532, 64
      %v2537 = vpop.permute.xlu0 %2536
      %2538 = vrot.lane.b32.xlu0 %v2533, 64
      %v2539 = vpop.permute.xlu0 %2538
      %2540 = vrot.lane.b32.xlu0 %v2534, 64
      %v2541 = vpop.permute.xlu0 %2540
      %2542 = vrot.lane.b32.xlu0 %v2535, 64
      %v2543 = vpop.permute.xlu0 %2542
      %v2544 = vsel %vm1946, %v2537, %v2539
      %v2545 = vsel %vm1946, %v2539, %v2541
      %v2546 = vsel %vm1946, %v2541, %v2543
      %v2552 = vmul.f32 %v558, %v2537
      %v2553 = vmul.f32 %v870, %v2544
      %v2554 = vmul.f32 %v1182, %v2545
      %v2555 = vmul.f32 %v1494, %v2546
      %v2556 = vmul.f32 %v1806, %v2543
      %v2557 = vmul.f32 %v562, %v2537
      %v2558 = vmul.f32 %v874, %v2544
      %v2559 = vmul.f32 %v1186, %v2545
      %v2560 = vmul.f32 %v1498, %v2546
      %v2561 = vmul.f32 %v1810, %v2543
      %v2562 = vmul.f32 %v566, %v2537
      %v2563 = vmul.f32 %v878, %v2544
      %v2564 = vmul.f32 %v1190, %v2545
      %v2565 = vmul.f32 %v1502, %v2546
      %v2566 = vmul.f32 %v1814, %v2543
      %v2582 = vrot.slane %v2552, 2
      %v2583 = vrot.slane %v2557, 2
      %v2584 = vsel %vm2370, %v2582, %v2583
      %v2585 = vrot.slane %v2553, 2
      %v2586 = vrot.slane %v2558, 2
      %v2587 = vsel %vm2370, %v2585, %v2586
      %v2588 = vrot.slane %v2554, 2
      %v2589 = vrot.slane %v2559, 2
      %v2590 = vsel %vm2370, %v2588, %v2589
      %v2591 = vrot.slane %v2555, 2
      %v2592 = vrot.slane %v2560, 2
      %v2593 = vsel %vm2370, %v2591, %v2592
      %v2594 = vrot.slane %v2556, 2
      %v2595 = vrot.slane %v2561, 2
      %v2596 = vsel %vm2370, %v2594, %v2595
      %v2597 = vrot.slane %v2562, 2
      %v2598 = vsel %vm2370, %v2583, %v2597
      %v2599 = vrot.slane %v2563, 2
      %v2600 = vsel %vm2370, %v2586, %v2599
      %v2601 = vrot.slane %v2564, 2
      %v2602 = vsel %vm2370, %v2589, %v2601
      %v2603 = vrot.slane %v2565, 2
      %v2604 = vsel %vm2370, %v2592, %v2603
      %v2605 = vrot.slane %v2566, 2
      %v2606 = vsel %vm2370, %v2595, %v2605
      %2607 = vrot.lane.b32.xlu0 %v2584, 64
      %v2608 = vpop.permute.xlu0 %2607
      %2609 = vrot.lane.b32.xlu0 %v2587, 64
      %v2610 = vpop.permute.xlu0 %2609
      %2611 = vrot.lane.b32.xlu0 %v2590, 64
      %v2612 = vpop.permute.xlu0 %2611
      %2613 = vrot.lane.b32.xlu0 %v2593, 64
      %v2614 = vpop.permute.xlu0 %2613
      %2615 = vrot.lane.b32.xlu0 %v2596, 64
      %v2616 = vpop.permute.xlu0 %2615
      %2617 = vrot.lane.b32.xlu0 %v2598, 64
      %v2618 = vpop.permute.xlu0 %2617
      %2619 = vrot.lane.b32.xlu0 %v2600, 64
      %v2620 = vpop.permute.xlu0 %2619
      %2621 = vrot.lane.b32.xlu0 %v2602, 64
      %v2622 = vpop.permute.xlu0 %2621
      %2623 = vrot.lane.b32.xlu0 %v2604, 64
      %v2624 = vpop.permute.xlu0 %2623
      %2625 = vrot.lane.b32.xlu0 %v2606, 64
      %v2626 = vpop.permute.xlu0 %2625
      %v2627 = vsel %vm1946, %v2608, %v2610
      %v2628 = vsel %vm1946, %v2610, %v2612
      %v2629 = vsel %vm1946, %v2612, %v2614
      %v2630 = vsel %vm1946, %v2614, %v2616
      %v2631 = vsel %vm1946, %v2618, %v2620
      %v2632 = vsel %vm1946, %v2620, %v2622
      %v2633 = vsel %vm1946, %v2622, %v2624
      %v2634 = vsel %vm1946, %v2624, %v2626
      %v2643 = vadd.f32 %v2521, %v2627
      %v2644 = vadd.f32 %v2522, %v2628
      %v2645 = vadd.f32 %v2523, %v2629
      %v2646 = vadd.f32 %v2524, %v2630
      %v2647 = vadd.f32 %v2525, %v2631
      %v2648 = vadd.f32 %v2526, %v2632
      %v2649 = vadd.f32 %v2527, %v2633
      %v2650 = vadd.f32 %v2528, %v2634
      %v2651 = vld [vmem:[%s3] sm:$0xf]
      %v2653 = vperm.slane %v2651, 0
      %v2654 = vperm.slane %v2651, 1
      %v2655 = vperm.slane %v2651, 2
      %v2656 = vperm.slane %v2651, 3
      %v2661 = vadd.f32 %v2643, %v2653
      %v2662 = vadd.f32 %v2644, %v2654
      %v2663 = vadd.f32 %v2645, %v2655
      %v2664 = vadd.f32 %v2646, %v2656
      %v2665 = vadd.f32 %v2647, %v2653
      %v2666 = vadd.f32 %v2648, %v2654
      %v2667 = vadd.f32 %v2649, %v2655
      %v2668 = vadd.f32 %v2650, %v2656
      %2669 = vst [vmem:[%s197] sm:$0xff] %v2661
      %2670 = vst [vmem:[%s197 + $0x8] sm:$0xff] %v2662
      %2671 = vst [vmem:[%s197 + $0x10] sm:$0xff] %v2663
      %2672 = vst [vmem:[%s197 + $0x18] sm:$0xff] %v2664
      %2673 = vst [vmem:[%s197 + $0x20] sm:$0xff] %v2665
      %2674 = vst [vmem:[%s197 + $0x28] sm:$0xff] %v2666
      %2675 = vst [vmem:[%s197 + $0x30] sm:$0xff] %v2667
      %2676 = vst [vmem:[%s197 + $0x38] sm:$0xff] %v2668
      %p2677 = scmp.lt.s32.totalorder %s15, 1
      %s2678 = scalar_select %p2677, %s15, 1
      %s2679 = smul.addr %s2678, 8
      %s2680 = smul.addr %s2679, 8
      %s2681 = scalar_lea.vmem %s4, %s2680
      // Predicated region
      $region37: #{bsconvu_forward.1} parent=35 // pred_check
        %p2682 = pneg %p122
      $region38: #{bsconvu_forward.1} parent=35 // pred_check_branch
        %2684 = sbr.rel (%p2682) target = $region40
      $region39: #{bsconvu_forward.1} parent=35 // pred_region
        _
      $region40: #{bsconvu_forward.1} parent=35 // pred_fallthru
        _
    $region36: #{bsconvu_forward.1} parent=5 // pred_fallthru
      _
    %p2685 = scmp.le.s32.totalorder 2, %s10
    // Predicated region
    $region41: #{bsconvu_forward.1} parent=5 // pred_check
      %p2686 = pneg %p2685
    $region42: #{bsconvu_forward.1} parent=5 // pred_check_branch
      %2688 = sbr.rel (%p2686) target = $region44
    $region43: #{bsconvu_forward.1} parent=5 // pred_region
      %s2689 = ssub.s32 %s10, 2
      // Predicated region
      $region45: #{bsconvu_forward.1} parent=43 // pred_check
        %p2690 = pneg %p128
      $region46: #{bsconvu_forward.1} parent=43 // pred_check_branch
        %2692 = sbr.rel (%p2690) target = $region48
      $region47: #{bsconvu_forward.1} parent=43 // pred_region
        %p2693 = scmp.lt.s32.totalorder %s16, 1
        %s2694 = scalar_select %p2693, %s16, 1
        %s2695 = smul.addr %s2694, 8
        %s2696 = smul.addr %s2695, 8
        %s2697 = scalar_lea.vmem %s4, %s2696
      $region48: #{bsconvu_forward.1} parent=43 // pred_fallthru
        _
    $region44: #{bsconvu_forward.1} parent=5 // pred_fallthru
      _
  $region6: #{bsconvu_forward.1} parent=0 // loop_footer
    %s14 = sadd.s32 1, %s10
  $region7: #{bsconvu_forward.1} parent=0 // loop_footer_branch
    %9 = sbr.rel target = $region3
  $region8: #{bsconvu_forward.1} parent=0 // loop_exit
    _

</llo_original>
